<compile_context>
chip_gen: v6e
topology: v6e:2x2x1
jax: 0.10.0
libtpu: 0.0.40
codegen_flags: <defaults>
</compile_context>

<pallas_src>
import math
import functools

import numpy as np
import jax
import jax.numpy as jnp
from jax.experimental import pallas as pl
from jax.experimental.pallas import tpu as pltpu


# ----------------------------- kernel helpers -----------------------------

def _layernorm(x, gamma, beta, eps=1e-5):
    # x: (T, C), gamma/beta: (1, C)
    mu = jnp.mean(x, axis=-1, keepdims=True)
    var = jnp.mean((x - mu) ** 2, axis=-1, keepdims=True)
    return (x - mu) * jax.lax.rsqrt(var + eps) * gamma + beta


def _gelu_erf(x):
    # exact (erf) GELU, matching the PyTorch reference gelu()
    return x * 0.5 * (1.0 + jax.lax.erf(x / math.sqrt(2.0)))


# ------------------------------- the kernel -------------------------------

def block_kernel(n_head,
                 x_ref, bias_ref,
                 ln1g_ref, ln1b_ref, ln2g_ref, ln2b_ref,
                 wq_ref, bq_ref, wk_ref, bk_ref, wv_ref, bv_ref,
                 wp_ref, bp_ref,
                 w1_ref, b1_ref, w2_ref, b2_ref,
                 o_ref):
    cdt = wq_ref.dtype                              # MXU operand dtype (f32 or bf16)
    x = x_ref[0].astype(jnp.float32)                # (T, C)
    T, C = x.shape
    H = n_head
    D = C // H
    bias = bias_ref[...]                            # (T, T) additive mask (-inf / 0)

    # ---- attention branch: x + proj(softmax(q k^T / sqrt(d)) v) ----
    # (the 1/sqrt(d) scale is already folded into wq/bq by the wrapper)
    h1 = _layernorm(x, ln1g_ref[...], ln1b_ref[...]).astype(cdt)
    q = jnp.dot(h1, wq_ref[...], preferred_element_type=jnp.float32) + bq_ref[...]
    k = jnp.dot(h1, wk_ref[...], preferred_element_type=jnp.float32) + bk_ref[...]
    v = jnp.dot(h1, wv_ref[...], preferred_element_type=jnp.float32) + bv_ref[...]

    # batch all heads into a single 3-D matmul: (H, T, D)
    q3 = jnp.swapaxes(q.reshape(T, H, D), 0, 1).astype(cdt)
    k3 = jnp.swapaxes(k.reshape(T, H, D), 0, 1).astype(cdt)
    v3 = jnp.swapaxes(v.reshape(T, H, D), 0, 1).astype(cdt)

    att = jnp.einsum('hqd,hkd->hqk', q3, k3,
                     preferred_element_type=jnp.float32)          # (H, T, T)
    att = att + bias[None]                                        # broadcast over heads

    # softmax (numerically stable, approx reciprocal on the EUP)
    m = jnp.max(att, axis=-1, keepdims=True)
    e = jnp.exp(att - m)
    s = jnp.sum(e, axis=-1, keepdims=True)
    p = e * pl.reciprocal(s, approx=True)

    yh = jnp.einsum('hqk,hkd->hqd', p.astype(cdt), v3,
                    preferred_element_type=jnp.float32)           # (H, T, D)
    y = jnp.swapaxes(yh, 0, 1).reshape(T, C)                      # (T, C)

    attn_out = jnp.dot(y.astype(cdt), wp_ref[...],
                       preferred_element_type=jnp.float32) + bp_ref[...]
    x = x + attn_out

    # ---- MLP branch: x + W2(gelu(W1 ln2(x))) ----
    h2 = _layernorm(x, ln2g_ref[...], ln2b_ref[...]).astype(cdt)
    mlp = jnp.dot(h2, w1_ref[...], preferred_element_type=jnp.float32) + b1_ref[...]
    mlp = _gelu_erf(mlp)
    mlp = jnp.dot(mlp.astype(cdt), w2_ref[...],
                  preferred_element_type=jnp.float32) + b2_ref[...]
    x = x + mlp

    o_ref[0] = x.astype(o_ref.dtype)


# ------------------------------ wrapper ------------------------------

def block_forward(x, mask, params, n_head, compute_dtype=jnp.float32):
    """x: (B, T, C) float32; mask: (T, T) int (0 = masked out)."""
    B, T, C = x.shape
    D = C // n_head
    scale = 1.0 / math.sqrt(D)
    f32 = jnp.float32

    # Precompute the additive attention-mask bias once (wrapper side).
    mask_bias = jnp.where(mask == 0, -jnp.inf, 0.0).astype(f32)

    # Fold the 1/sqrt(D) attention scale into the query projection (exact rewrite),
    # and cast matmul weights to the MXU operand dtype. Biases stay f32.
    wq = (params["wq"] * scale).astype(compute_dtype)
    bq = (params["bq"] * scale).astype(f32)
    wk = params["wk"].astype(compute_dtype); bk = params["bk"].astype(f32)
    wv = params["wv"].astype(compute_dtype); bv = params["bv"].astype(f32)
    wp = params["wp"].astype(compute_dtype); bp = params["bp"].astype(f32)
    w1 = params["w1"].astype(compute_dtype); b1 = params["b1"].astype(f32)
    w2 = params["w2"].astype(compute_dtype); b2 = params["b2"].astype(f32)
    ln1g = params["ln1_g"].astype(f32); ln1b = params["ln1_b"].astype(f32)
    ln2g = params["ln2_g"].astype(f32); ln2b = params["ln2_b"].astype(f32)

    args = (x, mask_bias,
            ln1g, ln1b, ln2g, ln2b,
            wq, bq, wk, bk, wv, bv, wp, bp,
            w1, b1, w2, b2)

    full2d = lambda shape: pl.BlockSpec(shape, lambda b: (0, 0))
    in_specs = [
        pl.BlockSpec((1, T, C), lambda b: (b, 0, 0)),        # x (per-batch tile)
        full2d((T, T)),                                      # additive mask bias
        full2d((1, C)), full2d((1, C)),                      # ln1 g, b
        full2d((1, C)), full2d((1, C)),                      # ln2 g, b
        full2d((C, C)), full2d((1, C)),                      # wq, bq (scale folded)
        full2d((C, C)), full2d((1, C)),                      # wk, bk
        full2d((C, C)), full2d((1, C)),                      # wv, bv
        full2d((C, C)), full2d((1, C)),                      # wp, bp
        full2d((C, 4 * C)), full2d((1, 4 * C)),              # w1, b1
        full2d((4 * C, C)), full2d((1, C)),                  # w2, b2
    ]

    # --- advisory cost estimate + explicit VMEM budget ---
    in_bytes = sum(int(np.prod(a.shape)) * a.dtype.itemsize for a in args)
    out_bytes = B * T * C * x.dtype.itemsize
    flops = int(B * (24 * T * C * C + 4 * T * T * C))
    transcendentals = int(B * (n_head * T * T + 4 * T * C + 4 * T))
    cost = pl.CostEstimate(flops=flops, transcendentals=transcendentals,
                           bytes_accessed=int(in_bytes + out_bytes))

    # per-grid-step input blocks (x only takes one batch row per step)
    block_bytes = in_bytes - (B - 1) * T * C * x.dtype.itemsize
    act_bytes = 4 * (8 * T * C + 8 * T * C + 3 * n_head * T * T)   # live f32 activations
    vmem_limit = int(min(max(2 * block_bytes + act_bytes + (8 << 20), 32 << 20),
                         48 << 20))

    kernel = functools.partial(block_kernel, n_head)
    return pl.pallas_call(
        kernel,
        out_shape=jax.ShapeDtypeStruct((B, T, C), x.dtype),
        grid_spec=pltpu.PrefetchScalarGridSpec(
            num_scalar_prefetch=0,
            grid=(B,),
            in_specs=in_specs,
            out_specs=pl.BlockSpec((1, T, C), lambda b: (b, 0, 0)),
        ),
        compiler_params=pltpu.CompilerParams(
            dimension_semantics=("parallel",),
            vmem_limit_bytes=vmem_limit),
        cost_estimate=cost,
    )(*args)


# --------------------------- pure-JAX reference ---------------------------

def block_reference(x, mask, params, n_head):
    def ln(x, g, b):
        mu = jnp.mean(x, axis=-1, keepdims=True)
        var = jnp.mean((x - mu) ** 2, axis=-1, keepdims=True)
        return (x - mu) / jnp.sqrt(var + 1e-5) * g + b

    B, T, C = x.shape
    D = C // n_head
    h1 = ln(x, params["ln1_g"], params["ln1_b"])
    q = h1 @ params["wq"] + params["bq"]
    k = h1 @ params["wk"] + params["bk"]
    v = h1 @ params["wv"] + params["bv"]
    q = q.reshape(B, T, n_head, D).transpose(0, 2, 1, 3)
    k = k.reshape(B, T, n_head, D).transpose(0, 2, 1, 3)
    v = v.reshape(B, T, n_head, D).transpose(0, 2, 1, 3)
    att = (q @ jnp.swapaxes(k, -2, -1)) / math.sqrt(D)
    att = jnp.where(mask[None, None] == 0, -jnp.inf, att)
    att = jax.nn.softmax(att, axis=-1)
    y = (att @ v).transpose(0, 2, 1, 3).reshape(B, T, C)
    x = x + y @ params["wp"] + params["bp"]
    h2 = ln(x, params["ln2_g"], params["ln2_b"])
    m = h2 @ params["w1"] + params["b1"]
    m = m * 0.5 * (1.0 + jax.lax.erf(m / math.sqrt(2.0)))
    m = m @ params["w2"] + params["b2"]
    return x + m


# --------------------------------- main ---------------------------------

if __name__ == "__main__":
    B, T, C, n_head = 2, 8, 32, 4

    key = jax.random.PRNGKey(0)
    keys = jax.random.split(key, 17)

    def lin(kw, kb, fan_in, fan_out):
        # deterministic small-scale init; weight stored as (in, out)
        w = jax.random.normal(kw, (fan_in, fan_out), jnp.float32) * 0.02
        b = jax.random.normal(kb, (1, fan_out), jnp.float32) * 0.02
        return w, b

    params = {}
    params["wq"], params["bq"] = lin(keys[0], keys[1], C, C)
    params["wk"], params["bk"] = lin(keys[2], keys[3], C, C)
    params["wv"], params["bv"] = lin(keys[4], keys[5], C, C)
    params["wp"], params["bp"] = lin(keys[6], keys[7], C, C)
    params["w1"], params["b1"] = lin(keys[8], keys[9], C, 4 * C)
    params["w2"], params["b2"] = lin(keys[10], keys[11], 4 * C, C)
    # LayerNorm params (PyTorch default is ones/zeros; perturb slightly but deterministically)
    params["ln1_g"] = 1.0 + 0.01 * jax.random.normal(keys[12], (1, C), jnp.float32)
    params["ln1_b"] = 0.01 * jax.random.normal(keys[13], (1, C), jnp.float32)
    params["ln2_g"] = 1.0 + 0.01 * jax.random.normal(keys[14], (1, C), jnp.float32)
    params["ln2_b"] = 0.01 * jax.random.normal(keys[15], (1, C), jnp.float32)

    x = jax.random.normal(keys[16], (B, T, C), jnp.float32)
    # causal mask (lower triangular), 0 => masked, matching `masked_fill(mask == 0, -inf)`
    mask = jnp.tril(jnp.ones((T, T), jnp.int32))

    ref = block_reference(x, mask, params, n_head)

    # f32 MXU operands (tight check; tolerance covers the approx softmax reciprocal)
    out_f32 = jax.block_until_ready(block_forward(x, mask, params, n_head,
                                                  compute_dtype=jnp.float32))
    np.testing.assert_allclose(np.asarray(out_f32), np.asarray(ref),
                               rtol=2e-3, atol=2e-3)

    # bf16 MXU operands (recommended on v6e/v7x; f32 accumulation), loose check
    out_bf16 = jax.block_until_ready(block_forward(x, mask, params, n_head,
                                                   compute_dtype=jnp.bfloat16))
    np.testing.assert_allclose(np.asarray(out_bf16), np.asarray(ref),
                               rtol=5e-2, atol=5e-2)

    print("KERNEL_OK")
</pallas_src>

<mosaic_0001>
module attributes {stable_mosaic.version = 11 : i64} {
  func.func @block_kernel(%arg0: i32, %arg1: memref<1x8x32xf32, #tpu.memory_space<vmem>>, %arg2: memref<8x8xf32, #tpu.memory_space<vmem>>, %arg3: memref<1x32xf32, #tpu.memory_space<vmem>>, %arg4: memref<1x32xf32, #tpu.memory_space<vmem>>, %arg5: memref<1x32xf32, #tpu.memory_space<vmem>>, %arg6: memref<1x32xf32, #tpu.memory_space<vmem>>, %arg7: memref<32x32xf32, #tpu.memory_space<vmem>>, %arg8: memref<1x32xf32, #tpu.memory_space<vmem>>, %arg9: memref<32x32xf32, #tpu.memory_space<vmem>>, %arg10: memref<1x32xf32, #tpu.memory_space<vmem>>, %arg11: memref<32x32xf32, #tpu.memory_space<vmem>>, %arg12: memref<1x32xf32, #tpu.memory_space<vmem>>, %arg13: memref<32x32xf32, #tpu.memory_space<vmem>>, %arg14: memref<1x32xf32, #tpu.memory_space<vmem>>, %arg15: memref<32x128xf32, #tpu.memory_space<vmem>>, %arg16: memref<1x128xf32, #tpu.memory_space<vmem>>, %arg17: memref<128x32xf32, #tpu.memory_space<vmem>>, %arg18: memref<1x32xf32, #tpu.memory_space<vmem>>, %arg19: memref<1x8x32xf32, #tpu.memory_space<vmem>>) attributes {dimension_semantics = [#tpu.dimension_semantics<parallel>], iteration_bounds = array<i64: 2>, scalar_prefetch = 0 : i64, scratch_operands = 0 : i64, tpu.core_type = #tpu.core_type<tc>, window_params = [{transform_indices = @transform_0, window_bounds = array<i64: 1, 8, 32>}, {pipeline_mode = #tpu.pipeline_mode<synchronous>, transform_indices = @transform_1, window_bounds = array<i64: 8, 8>}, {pipeline_mode = #tpu.pipeline_mode<synchronous>, transform_indices = @transform_2, window_bounds = array<i64: 1, 32>}, {pipeline_mode = #tpu.pipeline_mode<synchronous>, transform_indices = @transform_3, window_bounds = array<i64: 1, 32>}, {pipeline_mode = #tpu.pipeline_mode<synchronous>, transform_indices = @transform_4, window_bounds = array<i64: 1, 32>}, {pipeline_mode = #tpu.pipeline_mode<synchronous>, transform_indices = @transform_5, window_bounds = array<i64: 1, 32>}, {pipeline_mode = #tpu.pipeline_mode<synchronous>, transform_indices = @transform_6, window_bounds = array<i64: 32, 32>}, {pipeline_mode = #tpu.pipeline_mode<synchronous>, transform_indices = @transform_7, window_bounds = array<i64: 1, 32>}, {pipeline_mode = #tpu.pipeline_mode<synchronous>, transform_indices = @transform_8, window_bounds = array<i64: 32, 32>}, {pipeline_mode = #tpu.pipeline_mode<synchronous>, transform_indices = @transform_9, window_bounds = array<i64: 1, 32>}, {pipeline_mode = #tpu.pipeline_mode<synchronous>, transform_indices = @transform_10, window_bounds = array<i64: 32, 32>}, {pipeline_mode = #tpu.pipeline_mode<synchronous>, transform_indices = @transform_11, window_bounds = array<i64: 1, 32>}, {pipeline_mode = #tpu.pipeline_mode<synchronous>, transform_indices = @transform_12, window_bounds = array<i64: 32, 32>}, {pipeline_mode = #tpu.pipeline_mode<synchronous>, transform_indices = @transform_13, window_bounds = array<i64: 1, 32>}, {pipeline_mode = #tpu.pipeline_mode<synchronous>, transform_indices = @transform_14, window_bounds = array<i64: 32, 128>}, {pipeline_mode = #tpu.pipeline_mode<synchronous>, transform_indices = @transform_15, window_bounds = array<i64: 1, 128>}, {pipeline_mode = #tpu.pipeline_mode<synchronous>, transform_indices = @transform_16, window_bounds = array<i64: 128, 32>}, {pipeline_mode = #tpu.pipeline_mode<synchronous>, transform_indices = @transform_17, window_bounds = array<i64: 1, 32>}, {transform_indices = @transform_18, window_bounds = array<i64: 1, 8, 32>}]} {
    %c0 = arith.constant 0 : index
    %c0_0 = arith.constant 0 : index
    %c0_1 = arith.constant 0 : index
    %0 = vector.load %arg1[%c0, %c0_0, %c0_1] : memref<1x8x32xf32, #tpu.memory_space<vmem>>, vector<1x8x32xf32>
    %1 = vector.shape_cast %0 : vector<1x8x32xf32> to vector<8x32xf32>
    %c0_2 = arith.constant 0 : index
    %c0_3 = arith.constant 0 : index
    %2 = vector.load %arg2[%c0_2, %c0_3] : memref<8x8xf32, #tpu.memory_space<vmem>>, vector<8x8xf32>
    %c0_4 = arith.constant 0 : index
    %c0_5 = arith.constant 0 : index
    %3 = vector.load %arg3[%c0_4, %c0_5] : memref<1x32xf32, #tpu.memory_space<vmem>>, vector<1x32xf32>
    %c0_6 = arith.constant 0 : index
    %c0_7 = arith.constant 0 : index
    %4 = vector.load %arg4[%c0_6, %c0_7] : memref<1x32xf32, #tpu.memory_space<vmem>>, vector<1x32xf32>
    %cst = arith.constant dense<0.000000e+00> : vector<8xf32>
    %5 = vector.multi_reduction <add>, %1, %cst [1] : vector<8x32xf32> to vector<8xf32>
    %6 = vector.shape_cast %5 : vector<8xf32> to vector<8x1xf32>
    %cst_8 = arith.constant 3.200000e+01 : f32
    %7 = vector.broadcast %cst_8 : f32 to vector<8x1xf32>
    %8 = arith.divf %6, %7 : vector<8x1xf32>
    %9 = vector.broadcast %8 : vector<8x1xf32> to vector<8x32xf32>
    %10 = arith.subf %1, %9 : vector<8x32xf32>
    %11 = arith.mulf %10, %10 : vector<8x32xf32>
    %cst_9 = arith.constant dense<0.000000e+00> : vector<8xf32>
    %12 = vector.multi_reduction <add>, %11, %cst_9 [1] : vector<8x32xf32> to vector<8xf32>
    %13 = vector.shape_cast %12 : vector<8xf32> to vector<8x1xf32>
    %cst_10 = arith.constant 3.200000e+01 : f32
    %14 = vector.broadcast %cst_10 : f32 to vector<8x1xf32>
    %15 = arith.divf %13, %14 : vector<8x1xf32>
    %16 = vector.broadcast %8 : vector<8x1xf32> to vector<8x32xf32>
    %17 = arith.subf %1, %16 : vector<8x32xf32>
    %cst_11 = arith.constant 9.99999974E-6 : f32
    %18 = vector.broadcast %cst_11 : f32 to vector<8x1xf32>
    %19 = arith.addf %15, %18 : vector<8x1xf32>
    %20 = math.rsqrt %19 : vector<8x1xf32>
    %21 = vector.broadcast %20 : vector<8x1xf32> to vector<8x32xf32>
    %22 = arith.mulf %17, %21 : vector<8x32xf32>
    %23 = vector.broadcast %3 : vector<1x32xf32> to vector<8x32xf32>
    %24 = arith.mulf %22, %23 : vector<8x32xf32>
    %25 = vector.broadcast %4 : vector<1x32xf32> to vector<8x32xf32>
    %26 = arith.addf %24, %25 : vector<8x32xf32>
    %c0_12 = arith.constant 0 : index
    %c0_13 = arith.constant 0 : index
    %27 = vector.load %arg7[%c0_12, %c0_13] : memref<32x32xf32, #tpu.memory_space<vmem>>, vector<32x32xf32>
    %cst_14 = arith.constant dense<0.000000e+00> : vector<8x32xf32>
    %28 = tpu.matmul %26, %27, %cst_14 {dimension_numbers = #tpu.dot_dimension_numbers<[1], [0], [0], [1], [0, 0, 1, 1], [], []>} : vector<8x32xf32>, vector<32x32xf32>, vector<8x32xf32> -> vector<8x32xf32>
    %c0_15 = arith.constant 0 : index
    %c0_16 = arith.constant 0 : index
    %29 = vector.load %arg8[%c0_15, %c0_16] : memref<1x32xf32, #tpu.memory_space<vmem>>, vector<1x32xf32>
    %30 = vector.broadcast %29 : vector<1x32xf32> to vector<8x32xf32>
    %31 = arith.addf %28, %30 : vector<8x32xf32>
    %c0_17 = arith.constant 0 : index
    %c0_18 = arith.constant 0 : index
    %32 = vector.load %arg9[%c0_17, %c0_18] : memref<32x32xf32, #tpu.memory_space<vmem>>, vector<32x32xf32>
    %cst_19 = arith.constant dense<0.000000e+00> : vector<8x32xf32>
    %33 = tpu.matmul %26, %32, %cst_19 {dimension_numbers = #tpu.dot_dimension_numbers<[1], [0], [0], [1], [0, 0, 1, 1], [], []>} : vector<8x32xf32>, vector<32x32xf32>, vector<8x32xf32> -> vector<8x32xf32>
    %c0_20 = arith.constant 0 : index
    %c0_21 = arith.constant 0 : index
    %34 = vector.load %arg10[%c0_20, %c0_21] : memref<1x32xf32, #tpu.memory_space<vmem>>, vector<1x32xf32>
    %35 = vector.broadcast %34 : vector<1x32xf32> to vector<8x32xf32>
    %36 = arith.addf %33, %35 : vector<8x32xf32>
    %c0_22 = arith.constant 0 : index
    %c0_23 = arith.constant 0 : index
    %37 = vector.load %arg11[%c0_22, %c0_23] : memref<32x32xf32, #tpu.memory_space<vmem>>, vector<32x32xf32>
    %cst_24 = arith.constant dense<0.000000e+00> : vector<8x32xf32>
    %38 = tpu.matmul %26, %37, %cst_24 {dimension_numbers = #tpu.dot_dimension_numbers<[1], [0], [0], [1], [0, 0, 1, 1], [], []>} : vector<8x32xf32>, vector<32x32xf32>, vector<8x32xf32> -> vector<8x32xf32>
    %c0_25 = arith.constant 0 : index
    %c0_26 = arith.constant 0 : index
    %39 = vector.load %arg12[%c0_25, %c0_26] : memref<1x32xf32, #tpu.memory_space<vmem>>, vector<1x32xf32>
    %40 = vector.broadcast %39 : vector<1x32xf32> to vector<8x32xf32>
    %41 = arith.addf %38, %40 : vector<8x32xf32>
    %42 = vector.shape_cast %31 : vector<8x32xf32> to vector<8x4x8xf32>
    %43 = tpu.transpose %42, [1, 0, 2] : vector<8x4x8xf32> -> vector<4x8x8xf32>
    %44 = vector.shape_cast %36 : vector<8x32xf32> to vector<8x4x8xf32>
    %45 = tpu.transpose %44, [1, 0, 2] : vector<8x4x8xf32> -> vector<4x8x8xf32>
    %46 = vector.shape_cast %41 : vector<8x32xf32> to vector<8x4x8xf32>
    %47 = tpu.transpose %46, [1, 0, 2] : vector<8x4x8xf32> -> vector<4x8x8xf32>
    "tpu.trace_start"() <{level = 10 : i32, message = "hqd,hkd->hqk"}> : () -> ()
    %cst_27 = arith.constant dense<0.000000e+00> : vector<4x8x8xf32>
    %48 = tpu.matmul %43, %45, %cst_27 {dimension_numbers = #tpu.dot_dimension_numbers<[2], [2], [1], [1], [0, 0, 0, 1, 1, 1], [0], [0]>} : vector<4x8x8xf32>, vector<4x8x8xf32>, vector<4x8x8xf32> -> vector<4x8x8xf32>
    "tpu.trace_stop"() : () -> ()
    %49 = vector.shape_cast %2 : vector<8x8xf32> to vector<1x8x8xf32>
    %50 = vector.broadcast %49 : vector<1x8x8xf32> to vector<4x8x8xf32>
    %51 = arith.addf %48, %50 : vector<4x8x8xf32>
    %cst_28 = arith.constant dense<0xFF800000> : vector<4x8xf32>
    %52 = vector.multi_reduction <maximumf>, %51, %cst_28 [2] : vector<4x8x8xf32> to vector<4x8xf32>
    %53 = vector.shape_cast %52 : vector<4x8xf32> to vector<4x8x1xf32>
    %54 = vector.broadcast %53 : vector<4x8x1xf32> to vector<4x8x8xf32>
    %55 = arith.subf %51, %54 : vector<4x8x8xf32>
    %56 = math.exp %55 : vector<4x8x8xf32>
    %cst_29 = arith.constant dense<0.000000e+00> : vector<4x8xf32>
    %57 = vector.multi_reduction <add>, %56, %cst_29 [2] : vector<4x8x8xf32> to vector<4x8xf32>
    %58 = vector.shape_cast %57 : vector<4x8xf32> to vector<4x8x1xf32>
    %59 = tpu.reciprocal %58 {approx = true} : vector<4x8x1xf32> -> vector<4x8x1xf32>
    %60 = vector.broadcast %59 : vector<4x8x1xf32> to vector<4x8x8xf32>
    %61 = arith.mulf %56, %60 : vector<4x8x8xf32>
    "tpu.trace_start"() <{level = 10 : i32, message = "hqk,hkd->hqd"}> : () -> ()
    %cst_30 = arith.constant dense<0.000000e+00> : vector<4x8x8xf32>
    %62 = tpu.matmul %61, %47, %cst_30 {dimension_numbers = #tpu.dot_dimension_numbers<[2], [1], [1], [2], [0, 0, 0, 1, 1, 2], [0], [0]>} : vector<4x8x8xf32>, vector<4x8x8xf32>, vector<4x8x8xf32> -> vector<4x8x8xf32>
    "tpu.trace_stop"() : () -> ()
    %63 = tpu.transpose %62, [1, 0, 2] : vector<4x8x8xf32> -> vector<8x4x8xf32>
    %64 = vector.shape_cast %63 : vector<8x4x8xf32> to vector<8x32xf32>
    %c0_31 = arith.constant 0 : index
    %c0_32 = arith.constant 0 : index
    %65 = vector.load %arg13[%c0_31, %c0_32] : memref<32x32xf32, #tpu.memory_space<vmem>>, vector<32x32xf32>
    %cst_33 = arith.constant dense<0.000000e+00> : vector<8x32xf32>
    %66 = tpu.matmul %64, %65, %cst_33 {dimension_numbers = #tpu.dot_dimension_numbers<[1], [0], [0], [1], [0, 0, 1, 1], [], []>} : vector<8x32xf32>, vector<32x32xf32>, vector<8x32xf32> -> vector<8x32xf32>
    %c0_34 = arith.constant 0 : index
    %c0_35 = arith.constant 0 : index
    %67 = vector.load %arg14[%c0_34, %c0_35] : memref<1x32xf32, #tpu.memory_space<vmem>>, vector<1x32xf32>
    %68 = vector.broadcast %67 : vector<1x32xf32> to vector<8x32xf32>
    %69 = arith.addf %66, %68 : vector<8x32xf32>
    %70 = arith.addf %1, %69 : vector<8x32xf32>
    %c0_36 = arith.constant 0 : index
    %c0_37 = arith.constant 0 : index
    %71 = vector.load %arg5[%c0_36, %c0_37] : memref<1x32xf32, #tpu.memory_space<vmem>>, vector<1x32xf32>
    %c0_38 = arith.constant 0 : index
    %c0_39 = arith.constant 0 : index
    %72 = vector.load %arg6[%c0_38, %c0_39] : memref<1x32xf32, #tpu.memory_space<vmem>>, vector<1x32xf32>
    %cst_40 = arith.constant dense<0.000000e+00> : vector<8xf32>
    %73 = vector.multi_reduction <add>, %70, %cst_40 [1] : vector<8x32xf32> to vector<8xf32>
    %74 = vector.shape_cast %73 : vector<8xf32> to vector<8x1xf32>
    %cst_41 = arith.constant 3.200000e+01 : f32
    %75 = vector.broadcast %cst_41 : f32 to vector<8x1xf32>
    %76 = arith.divf %74, %75 : vector<8x1xf32>
    %77 = vector.broadcast %76 : vector<8x1xf32> to vector<8x32xf32>
    %78 = arith.subf %70, %77 : vector<8x32xf32>
    %79 = arith.mulf %78, %78 : vector<8x32xf32>
    %cst_42 = arith.constant dense<0.000000e+00> : vector<8xf32>
    %80 = vector.multi_reduction <add>, %79, %cst_42 [1] : vector<8x32xf32> to vector<8xf32>
    %81 = vector.shape_cast %80 : vector<8xf32> to vector<8x1xf32>
    %cst_43 = arith.constant 3.200000e+01 : f32
    %82 = vector.broadcast %cst_43 : f32 to vector<8x1xf32>
    %83 = arith.divf %81, %82 : vector<8x1xf32>
    %84 = vector.broadcast %76 : vector<8x1xf32> to vector<8x32xf32>
    %85 = arith.subf %70, %84 : vector<8x32xf32>
    %cst_44 = arith.constant 9.99999974E-6 : f32
    %86 = vector.broadcast %cst_44 : f32 to vector<8x1xf32>
    %87 = arith.addf %83, %86 : vector<8x1xf32>
    %88 = math.rsqrt %87 : vector<8x1xf32>
    %89 = vector.broadcast %88 : vector<8x1xf32> to vector<8x32xf32>
    %90 = arith.mulf %85, %89 : vector<8x32xf32>
    %91 = vector.broadcast %71 : vector<1x32xf32> to vector<8x32xf32>
    %92 = arith.mulf %90, %91 : vector<8x32xf32>
    %93 = vector.broadcast %72 : vector<1x32xf32> to vector<8x32xf32>
    %94 = arith.addf %92, %93 : vector<8x32xf32>
    %c0_45 = arith.constant 0 : index
    %c0_46 = arith.constant 0 : index
    %95 = vector.load %arg15[%c0_45, %c0_46] : memref<32x128xf32, #tpu.memory_space<vmem>>, vector<32x128xf32>
    %cst_47 = arith.constant dense<0.000000e+00> : vector<8x128xf32>
    %96 = tpu.matmul %94, %95, %cst_47 {dimension_numbers = #tpu.dot_dimension_numbers<[1], [0], [0], [1], [0, 0, 1, 1], [], []>} : vector<8x32xf32>, vector<32x128xf32>, vector<8x128xf32> -> vector<8x128xf32>
    %c0_48 = arith.constant 0 : index
    %c0_49 = arith.constant 0 : index
    %97 = vector.load %arg16[%c0_48, %c0_49] : memref<1x128xf32, #tpu.memory_space<vmem>>, vector<1x128xf32>
    %98 = vector.broadcast %97 : vector<1x128xf32> to vector<8x128xf32>
    %99 = arith.addf %96, %98 : vector<8x128xf32>
    %cst_50 = arith.constant 5.000000e-01 : f32
    %100 = vector.broadcast %cst_50 : f32 to vector<8x128xf32>
    %101 = arith.mulf %99, %100 : vector<8x128xf32>
    %cst_51 = arith.constant 1.41421354 : f32
    %102 = vector.broadcast %cst_51 : f32 to vector<8x128xf32>
    %103 = arith.divf %99, %102 : vector<8x128xf32>
    %104 = math.erf %103 : vector<8x128xf32>
    %cst_52 = arith.constant 1.000000e+00 : f32
    %105 = vector.broadcast %cst_52 : f32 to vector<8x128xf32>
    %106 = arith.addf %105, %104 : vector<8x128xf32>
    %107 = arith.mulf %101, %106 : vector<8x128xf32>
    %c0_53 = arith.constant 0 : index
    %c0_54 = arith.constant 0 : index
    %108 = vector.load %arg17[%c0_53, %c0_54] : memref<128x32xf32, #tpu.memory_space<vmem>>, vector<128x32xf32>
    %cst_55 = arith.constant dense<0.000000e+00> : vector<8x32xf32>
    %109 = tpu.matmul %107, %108, %cst_55 {dimension_numbers = #tpu.dot_dimension_numbers<[1], [0], [0], [1], [0, 0, 1, 1], [], []>} : vector<8x128xf32>, vector<128x32xf32>, vector<8x32xf32> -> vector<8x32xf32>
    %c0_56 = arith.constant 0 : index
    %c0_57 = arith.constant 0 : index
    %110 = vector.load %arg18[%c0_56, %c0_57] : memref<1x32xf32, #tpu.memory_space<vmem>>, vector<1x32xf32>
    %111 = vector.broadcast %110 : vector<1x32xf32> to vector<8x32xf32>
    %112 = arith.addf %109, %111 : vector<8x32xf32>
    %113 = arith.addf %70, %112 : vector<8x32xf32>
    %c0_58 = arith.constant 0 : index
    %c0_59 = arith.constant 0 : index
    %c0_60 = arith.constant 0 : index
    %114 = vector.load %arg19[%c0_58, %c0_59, %c0_60] : memref<1x8x32xf32, #tpu.memory_space<vmem>>, vector<1x8x32xf32>
    %115 = vector.shape_cast %114 : vector<1x8x32xf32> to vector<8x32xf32>
    %116 = vector.shape_cast %113 : vector<8x32xf32> to vector<1x8x32xf32>
    tpu.vector_store %arg19[%c0_58, %c0_59, %c0_60], %116 {strides = array<i32>} : memref<1x8x32xf32, #tpu.memory_space<vmem>>, vector<1x8x32xf32>,
    return
  }
  func.func @transform_0(%arg0: i32) -> (i32, i32, i32) {
    %c0_i32 = arith.constant 0 : i32
    %c0_i32_0 = arith.constant 0 : i32
    %c0_i32_1 = arith.constant 0 : i32
    return %arg0, %c0_i32, %c0_i32_0 : i32, i32, i32
  }
  func.func @transform_1(%arg0: i32) -> (i32, i32) {
    %c0_i32 = arith.constant 0 : i32
    %c0_i32_0 = arith.constant 0 : i32
    %c0_i32_1 = arith.constant 0 : i32
    return %c0_i32, %c0_i32_0 : i32, i32
  }
  func.func @transform_2(%arg0: i32) -> (i32, i32) {
    %c0_i32 = arith.constant 0 : i32
    %c0_i32_0 = arith.constant 0 : i32
    %c0_i32_1 = arith.constant 0 : i32
    return %c0_i32, %c0_i32_0 : i32, i32
  }
  func.func @transform_3(%arg0: i32) -> (i32, i32) {
    %c0_i32 = arith.constant 0 : i32
    %c0_i32_0 = arith.constant 0 : i32
    %c0_i32_1 = arith.constant 0 : i32
    return %c0_i32, %c0_i32_0 : i32, i32
  }
  func.func @transform_4(%arg0: i32) -> (i32, i32) {
    %c0_i32 = arith.constant 0 : i32
    %c0_i32_0 = arith.constant 0 : i32
    %c0_i32_1 = arith.constant 0 : i32
    return %c0_i32, %c0_i32_0 : i32, i32
  }
  func.func @transform_5(%arg0: i32) -> (i32, i32) {
    %c0_i32 = arith.constant 0 : i32
    %c0_i32_0 = arith.constant 0 : i32
    %c0_i32_1 = arith.constant 0 : i32
    return %c0_i32, %c0_i32_0 : i32, i32
  }
  func.func @transform_6(%arg0: i32) -> (i32, i32) {
    %c0_i32 = arith.constant 0 : i32
    %c0_i32_0 = arith.constant 0 : i32
    %c0_i32_1 = arith.constant 0 : i32
    return %c0_i32, %c0_i32_0 : i32, i32
  }
  func.func @transform_7(%arg0: i32) -> (i32, i32) {
    %c0_i32 = arith.constant 0 : i32
    %c0_i32_0 = arith.constant 0 : i32
    %c0_i32_1 = arith.constant 0 : i32
    return %c0_i32, %c0_i32_0 : i32, i32
  }
  func.func @transform_8(%arg0: i32) -> (i32, i32) {
    %c0_i32 = arith.constant 0 : i32
    %c0_i32_0 = arith.constant 0 : i32
    %c0_i32_1 = arith.constant 0 : i32
    return %c0_i32, %c0_i32_0 : i32, i32
  }
  func.func @transform_9(%arg0: i32) -> (i32, i32) {
    %c0_i32 = arith.constant 0 : i32
    %c0_i32_0 = arith.constant 0 : i32
    %c0_i32_1 = arith.constant 0 : i32
    return %c0_i32, %c0_i32_0 : i32, i32
  }
  func.func @transform_10(%arg0: i32) -> (i32, i32) {
    %c0_i32 = arith.constant 0 : i32
    %c0_i32_0 = arith.constant 0 : i32
    %c0_i32_1 = arith.constant 0 : i32
    return %c0_i32, %c0_i32_0 : i32, i32
  }
  func.func @transform_11(%arg0: i32) -> (i32, i32) {
    %c0_i32 = arith.constant 0 : i32
    %c0_i32_0 = arith.constant 0 : i32
    %c0_i32_1 = arith.constant 0 : i32
    return %c0_i32, %c0_i32_0 : i32, i32
  }
  func.func @transform_12(%arg0: i32) -> (i32, i32) {
    %c0_i32 = arith.constant 0 : i32
    %c0_i32_0 = arith.constant 0 : i32
    %c0_i32_1 = arith.constant 0 : i32
    return %c0_i32, %c0_i32_0 : i32, i32
  }
  func.func @transform_13(%arg0: i32) -> (i32, i32) {
    %c0_i32 = arith.constant 0 : i32
    %c0_i32_0 = arith.constant 0 : i32
    %c0_i32_1 = arith.constant 0 : i32
    return %c0_i32, %c0_i32_0 : i32, i32
  }
  func.func @transform_14(%arg0: i32) -> (i32, i32) {
    %c0_i32 = arith.constant 0 : i32
    %c0_i32_0 = arith.constant 0 : i32
    %c0_i32_1 = arith.constant 0 : i32
    return %c0_i32, %c0_i32_0 : i32, i32
  }
  func.func @transform_15(%arg0: i32) -> (i32, i32) {
    %c0_i32 = arith.constant 0 : i32
    %c0_i32_0 = arith.constant 0 : i32
    %c0_i32_1 = arith.constant 0 : i32
    return %c0_i32, %c0_i32_0 : i32, i32
  }
  func.func @transform_16(%arg0: i32) -> (i32, i32) {
    %c0_i32 = arith.constant 0 : i32
    %c0_i32_0 = arith.constant 0 : i32
    %c0_i32_1 = arith.constant 0 : i32
    return %c0_i32, %c0_i32_0 : i32, i32
  }
  func.func @transform_17(%arg0: i32) -> (i32, i32) {
    %c0_i32 = arith.constant 0 : i32
    %c0_i32_0 = arith.constant 0 : i32
    %c0_i32_1 = arith.constant 0 : i32
    return %c0_i32, %c0_i32_0 : i32, i32
  }
  func.func @transform_18(%arg0: i32) -> (i32, i32, i32) {
    %c0_i32 = arith.constant 0 : i32
    %c0_i32_0 = arith.constant 0 : i32
    %c0_i32_1 = arith.constant 0 : i32
    return %arg0, %c0_i32, %c0_i32_0 : i32, i32, i32
  }
}

</mosaic_0001>

<llo_original>
// kernel: tpu_custom_call.1
$region0: #{tpu_custom_call.1}
  #allocation0 [shape = 'u32[]', space=smem, size = 0x4, offset = 0x4, fixed_abs, tag = 'smem constant byte address 0x4 - core index']
  #allocation1 [shape = 'u32[144,128]{1,0:T(1,128)}', space=vmem, size = 0x12000, scoped, tag = 'internal scratch']
  %s0 = inlined_call_operand.hbm [shape: f32[2,8,32], index: 0, kind: input, shape index: {}]
  %s1 = inlined_call_operand.hbm [shape: f32[8,8], index: 1, kind: input, shape index: {}]
  %s2 = inlined_call_operand.vmem [shape: f32[1,32], index: 2, kind: input, shape index: {}]
  %s3 = inlined_call_operand.vmem [shape: f32[1,32], index: 3, kind: input, shape index: {}]
  %s4 = inlined_call_operand.vmem [shape: f32[1,32], index: 4, kind: input, shape index: {}]
  %s5 = inlined_call_operand.vmem [shape: f32[1,32], index: 5, kind: input, shape index: {}]
  %s6 = inlined_call_operand.vmem [shape: f32[32,32], index: 6, kind: input, shape index: {}]
  %s7 = inlined_call_operand.vmem [shape: f32[1,32], index: 7, kind: input, shape index: {}]
  %s8 = inlined_call_operand.vmem [shape: f32[32,32], index: 8, kind: input, shape index: {}]
  %s9 = inlined_call_operand.vmem [shape: f32[1,32], index: 9, kind: input, shape index: {}]
  %s10 = inlined_call_operand.vmem [shape: f32[32,32], index: 10, kind: input, shape index: {}]
  %s11 = inlined_call_operand.vmem [shape: f32[1,32], index: 11, kind: input, shape index: {}]
  %s12 = inlined_call_operand.vmem [shape: f32[32,32], index: 12, kind: input, shape index: {}]
  %s13 = inlined_call_operand.vmem [shape: f32[1,32], index: 13, kind: input, shape index: {}]
  %s14 = inlined_call_operand.vmem [shape: f32[32,128], index: 14, kind: input, shape index: {}]
  %s15 = inlined_call_operand.vmem [shape: f32[1,128], index: 15, kind: input, shape index: {}]
  %s16 = inlined_call_operand.vmem [shape: f32[128,32], index: 16, kind: input, shape index: {}]
  %s17 = inlined_call_operand.vmem [shape: f32[1,32], index: 17, kind: input, shape index: {}]
  %s18 = inlined_call_operand.hbm [shape: f32[2,8,32], index: 18, kind: output, shape index: {}]
  %s19 = sld [smem:[#allocation0]]
  $region113: #{tpu_custom_call.1} parent=0
    _
  %s21 = ssub.s32 1, %s19
  %s22 = scalar_select 0, %s21, %s19
  $region1: #{tpu_custom_call.1} parent=0
    #allocation2 [shape = 'u8[8192]{0}', space=vmem, size = 0x2000, scoped, tag = 'input window, operand 0']
    #allocation3 [shape = 's32[2]{0}', space=sflag, size = 0x8, scoped, tag = 'scoped memory for tpu_custom_call.1']
    #allocation4 [shape = 's32[2]{0}', space=sflag, size = 0x8, scoped, tag = 'scoped memory for tpu_custom_call.1']
    #allocation5 [shape = 'u8[4096]{0}', space=vmem, size = 0x1000, scoped, tag = 'input window, operand 1, single buffered']
    #allocation6 [shape = 's32[1]{0}', space=sflag, size = 0x4, scoped, tag = 'scoped memory for tpu_custom_call.1']
    #allocation7 [shape = 'u8[8192]{0}', space=vmem, size = 0x2000, scoped, tag = 'output window, operand 0']
    %23 = vsyncpa [#allocation3], 0
    %s24 = scalar_lea.sflag [#allocation3], 1
    %25 = vsyncpa %s24, 0
    %26 = vsyncpa [#allocation6], 0
    %27 = vsyncpa [#allocation4], 0
    %s28 = scalar_lea.sflag [#allocation4], 1
    %29 = vsyncpa %s28, 0
    loop: start=0, step=1, limit=4
    $region2: #{tpu_custom_call.1} parent=1 // loop_pre_header
      _
    $region3: #{tpu_custom_call.1} parent=1 // loop_header
      %s31 = sphi 0, %s35
      %p32 = scmp.ge.s32.totalorder %s31, 4
      %s41 = sphi 0, %s43
      %s44 = sphi 0, %s41
      %s45 = sphi 0, %s44
      %s61 = sphi 0, %s45
      %s65 = sphi 0, %s65
      %s67 = sphi 0, %s65
      %s68 = sphi 0, %s67
      %s82 = sphi 0, %s68
      %s86 = sphi 0, %s86
      %s88 = sphi 0, %s86
      %s89 = sphi 0, %s88
      %s103 = sphi 0, %s89
      %s107 = sphi 0, %s107
      %s109 = sphi 0, %s107
      %s110 = sphi 0, %s109
      %s124 = sphi 0, %s110
      %s128 = sphi 0, %s128
      %s130 = sphi 0, %s128
      %s131 = sphi 0, %s130
      %s145 = sphi 0, %s131
      %s149 = sphi 0, %s149
      %s151 = sphi 0, %s149
      %s152 = sphi 0, %s151
      %s166 = sphi 0, %s152
      %s170 = sphi 0, %s170
      %s172 = sphi 0, %s170
      %s173 = sphi 0, %s172
      %s187 = sphi 0, %s173
      %s191 = sphi 0, %s191
      %s193 = sphi 0, %s191
      %s194 = sphi 0, %s193
      %s208 = sphi 0, %s194
      %s212 = sphi 0, %s212
      %s214 = sphi 0, %s212
      %s215 = sphi 0, %s214
      %s229 = sphi 0, %s215
      %s233 = sphi 0, %s233
      %s235 = sphi 0, %s233
      %s236 = sphi 0, %s235
      %s250 = sphi 0, %s236
      %s254 = sphi 0, %s254
      %s256 = sphi 0, %s254
      %s257 = sphi 0, %s256
      %s271 = sphi 0, %s257
      %s275 = sphi 0, %s275
      %s277 = sphi 0, %s275
      %s278 = sphi 0, %s277
      %s292 = sphi 0, %s278
      %s296 = sphi 0, %s296
      %s298 = sphi 0, %s296
      %s299 = sphi 0, %s298
      %s313 = sphi 0, %s299
      %s317 = sphi 0, %s317
      %s319 = sphi 0, %s317
      %s320 = sphi 0, %s319
      %s334 = sphi 0, %s320
      %s338 = sphi 0, %s338
      %s340 = sphi 0, %s338
      %s341 = sphi 0, %s340
      %s355 = sphi 0, %s341
      %s359 = sphi 0, %s359
      %s361 = sphi 0, %s359
      %s362 = sphi 0, %s361
      %s376 = sphi 0, %s362
      %s380 = sphi 0, %s380
      %s382 = sphi 0, %s380
      %s383 = sphi 0, %s382
      %s397 = sphi 0, %s383
      %s401 = sphi 0, %s401
      %s403 = sphi 0, %s401
      %s404 = sphi 0, %s403
      %s418 = sphi 0, %s404
      %s424 = sphi 0, %s426
      %s427 = sphi 0, %s424
      %s428 = sphi 0, %s427
      %s444 = sphi 0, %s428
    $region4: #{tpu_custom_call.1} parent=1 // loop_header_branch
      %34 = sbr.rel (%p32) target = $region8
    $region5: #{tpu_custom_call.1} parent=1 // loop_body
      %s36 = ssub.s32 %s31, 1
      %s37 = ssub.s32 %s31, 2
      %s38 = sadd.s32 %s31, 1
      %s39 = ssub.s32 %s31, %s38
      %p40 = scmp.eq.s32.totalorder %s39, 0
      %s42 = sadd.s32 %s41, 1
      %s43 = scalar_select %p40, %s41, %s42
      %p46 = pneg %p40
      %p47 = scmp.eq.s32.totalorder %s31, 1
      %p48 = por %p46, %p47
      %p49 = scmp.ne.s32.totalorder %s41, %s44
      %p50 = scmp.eq.s32.totalorder %s31, 0
      %p51 = por %p49, %p50
      %p52 = scmp.ne.s32.totalorder %s41, %s44
      %p53 = scmp.eq.s32.totalorder %s36, 1
      %p54 = por %p52, %p53
      %p55 = scmp.ne.s32.totalorder %s44, %s45
      %p56 = scmp.eq.s32.totalorder %s36, 0
      %p57 = por %p55, %p56
      %p58 = scmp.ne.s32.totalorder %s44, %s45
      %p59 = scmp.eq.s32.totalorder %s37, 1
      %p60 = por %p58, %p59
      %p62 = scmp.ne.s32.totalorder %s45, %s61
      %p63 = scmp.eq.s32.totalorder %s37, 0
      %p64 = por %p62, %p63
      %s66 = sadd.s32 %s65, 1
      %p69 = scmp.eq.s32.totalorder %s31, 1
      %p70 = scmp.ne.s32.totalorder %s65, %s67
      %p71 = scmp.eq.s32.totalorder %s31, 0
      %p72 = por %p70, %p71
      %p73 = scmp.ne.s32.totalorder %s65, %s67
      %p74 = scmp.eq.s32.totalorder %s36, 1
      %p75 = por %p73, %p74
      %p76 = scmp.ne.s32.totalorder %s67, %s68
      %p77 = scmp.eq.s32.totalorder %s36, 0
      %p78 = por %p76, %p77
      %p79 = scmp.ne.s32.totalorder %s67, %s68
      %p80 = scmp.eq.s32.totalorder %s37, 1
      %p81 = por %p79, %p80
      %p83 = scmp.ne.s32.totalorder %s68, %s82
      %p84 = scmp.eq.s32.totalorder %s37, 0
      %p85 = por %p83, %p84
      %s87 = sadd.s32 %s86, 1
      %p90 = scmp.eq.s32.totalorder %s31, 1
      %p91 = scmp.ne.s32.totalorder %s86, %s88
      %p92 = scmp.eq.s32.totalorder %s31, 0
      %p93 = por %p91, %p92
      %p94 = scmp.ne.s32.totalorder %s86, %s88
      %p95 = scmp.eq.s32.totalorder %s36, 1
      %p96 = por %p94, %p95
      %p97 = scmp.ne.s32.totalorder %s88, %s89
      %p98 = scmp.eq.s32.totalorder %s36, 0
      %p99 = por %p97, %p98
      %p100 = scmp.ne.s32.totalorder %s88, %s89
      %p101 = scmp.eq.s32.totalorder %s37, 1
      %p102 = por %p100, %p101
      %p104 = scmp.ne.s32.totalorder %s89, %s103
      %p105 = scmp.eq.s32.totalorder %s37, 0
      %p106 = por %p104, %p105
      %s108 = sadd.s32 %s107, 1
      %p111 = scmp.eq.s32.totalorder %s31, 1
      %p112 = scmp.ne.s32.totalorder %s107, %s109
      %p113 = scmp.eq.s32.totalorder %s31, 0
      %p114 = por %p112, %p113
      %p115 = scmp.ne.s32.totalorder %s107, %s109
      %p116 = scmp.eq.s32.totalorder %s36, 1
      %p117 = por %p115, %p116
      %p118 = scmp.ne.s32.totalorder %s109, %s110
      %p119 = scmp.eq.s32.totalorder %s36, 0
      %p120 = por %p118, %p119
      %p121 = scmp.ne.s32.totalorder %s109, %s110
      %p122 = scmp.eq.s32.totalorder %s37, 1
      %p123 = por %p121, %p122
      %p125 = scmp.ne.s32.totalorder %s110, %s124
      %p126 = scmp.eq.s32.totalorder %s37, 0
      %p127 = por %p125, %p126
      %s129 = sadd.s32 %s128, 1
      %p132 = scmp.eq.s32.totalorder %s31, 1
      %p133 = scmp.ne.s32.totalorder %s128, %s130
      %p134 = scmp.eq.s32.totalorder %s31, 0
      %p135 = por %p133, %p134
      %p136 = scmp.ne.s32.totalorder %s128, %s130
      %p137 = scmp.eq.s32.totalorder %s36, 1
      %p138 = por %p136, %p137
      %p139 = scmp.ne.s32.totalorder %s130, %s131
      %p140 = scmp.eq.s32.totalorder %s36, 0
      %p141 = por %p139, %p140
      %p142 = scmp.ne.s32.totalorder %s130, %s131
      %p143 = scmp.eq.s32.totalorder %s37, 1
      %p144 = por %p142, %p143
      %p146 = scmp.ne.s32.totalorder %s131, %s145
      %p147 = scmp.eq.s32.totalorder %s37, 0
      %p148 = por %p146, %p147
      %s150 = sadd.s32 %s149, 1
      %p153 = scmp.eq.s32.totalorder %s31, 1
      %p154 = scmp.ne.s32.totalorder %s149, %s151
      %p155 = scmp.eq.s32.totalorder %s31, 0
      %p156 = por %p154, %p155
      %p157 = scmp.ne.s32.totalorder %s149, %s151
      %p158 = scmp.eq.s32.totalorder %s36, 1
      %p159 = por %p157, %p158
      %p160 = scmp.ne.s32.totalorder %s151, %s152
      %p161 = scmp.eq.s32.totalorder %s36, 0
      %p162 = por %p160, %p161
      %p163 = scmp.ne.s32.totalorder %s151, %s152
      %p164 = scmp.eq.s32.totalorder %s37, 1
      %p165 = por %p163, %p164
      %p167 = scmp.ne.s32.totalorder %s152, %s166
      %p168 = scmp.eq.s32.totalorder %s37, 0
      %p169 = por %p167, %p168
      %s171 = sadd.s32 %s170, 1
      %p174 = scmp.eq.s32.totalorder %s31, 1
      %p175 = scmp.ne.s32.totalorder %s170, %s172
      %p176 = scmp.eq.s32.totalorder %s31, 0
      %p177 = por %p175, %p176
      %p178 = scmp.ne.s32.totalorder %s170, %s172
      %p179 = scmp.eq.s32.totalorder %s36, 1
      %p180 = por %p178, %p179
      %p181 = scmp.ne.s32.totalorder %s172, %s173
      %p182 = scmp.eq.s32.totalorder %s36, 0
      %p183 = por %p181, %p182
      %p184 = scmp.ne.s32.totalorder %s172, %s173
      %p185 = scmp.eq.s32.totalorder %s37, 1
      %p186 = por %p184, %p185
      %p188 = scmp.ne.s32.totalorder %s173, %s187
      %p189 = scmp.eq.s32.totalorder %s37, 0
      %p190 = por %p188, %p189
      %s192 = sadd.s32 %s191, 1
      %p195 = scmp.eq.s32.totalorder %s31, 1
      %p196 = scmp.ne.s32.totalorder %s191, %s193
      %p197 = scmp.eq.s32.totalorder %s31, 0
      %p198 = por %p196, %p197
      %p199 = scmp.ne.s32.totalorder %s191, %s193
      %p200 = scmp.eq.s32.totalorder %s36, 1
      %p201 = por %p199, %p200
      %p202 = scmp.ne.s32.totalorder %s193, %s194
      %p203 = scmp.eq.s32.totalorder %s36, 0
      %p204 = por %p202, %p203
      %p205 = scmp.ne.s32.totalorder %s193, %s194
      %p206 = scmp.eq.s32.totalorder %s37, 1
      %p207 = por %p205, %p206
      %p209 = scmp.ne.s32.totalorder %s194, %s208
      %p210 = scmp.eq.s32.totalorder %s37, 0
      %p211 = por %p209, %p210
      %s213 = sadd.s32 %s212, 1
      %p216 = scmp.eq.s32.totalorder %s31, 1
      %p217 = scmp.ne.s32.totalorder %s212, %s214
      %p218 = scmp.eq.s32.totalorder %s31, 0
      %p219 = por %p217, %p218
      %p220 = scmp.ne.s32.totalorder %s212, %s214
      %p221 = scmp.eq.s32.totalorder %s36, 1
      %p222 = por %p220, %p221
      %p223 = scmp.ne.s32.totalorder %s214, %s215
      %p224 = scmp.eq.s32.totalorder %s36, 0
      %p225 = por %p223, %p224
      %p226 = scmp.ne.s32.totalorder %s214, %s215
      %p227 = scmp.eq.s32.totalorder %s37, 1
      %p228 = por %p226, %p227
      %p230 = scmp.ne.s32.totalorder %s215, %s229
      %p231 = scmp.eq.s32.totalorder %s37, 0
      %p232 = por %p230, %p231
      %s234 = sadd.s32 %s233, 1
      %p237 = scmp.eq.s32.totalorder %s31, 1
      %p238 = scmp.ne.s32.totalorder %s233, %s235
      %p239 = scmp.eq.s32.totalorder %s31, 0
      %p240 = por %p238, %p239
      %p241 = scmp.ne.s32.totalorder %s233, %s235
      %p242 = scmp.eq.s32.totalorder %s36, 1
      %p243 = por %p241, %p242
      %p244 = scmp.ne.s32.totalorder %s235, %s236
      %p245 = scmp.eq.s32.totalorder %s36, 0
      %p246 = por %p244, %p245
      %p247 = scmp.ne.s32.totalorder %s235, %s236
      %p248 = scmp.eq.s32.totalorder %s37, 1
      %p249 = por %p247, %p248
      %p251 = scmp.ne.s32.totalorder %s236, %s250
      %p252 = scmp.eq.s32.totalorder %s37, 0
      %p253 = por %p251, %p252
      %s255 = sadd.s32 %s254, 1
      %p258 = scmp.eq.s32.totalorder %s31, 1
      %p259 = scmp.ne.s32.totalorder %s254, %s256
      %p260 = scmp.eq.s32.totalorder %s31, 0
      %p261 = por %p259, %p260
      %p262 = scmp.ne.s32.totalorder %s254, %s256
      %p263 = scmp.eq.s32.totalorder %s36, 1
      %p264 = por %p262, %p263
      %p265 = scmp.ne.s32.totalorder %s256, %s257
      %p266 = scmp.eq.s32.totalorder %s36, 0
      %p267 = por %p265, %p266
      %p268 = scmp.ne.s32.totalorder %s256, %s257
      %p269 = scmp.eq.s32.totalorder %s37, 1
      %p270 = por %p268, %p269
      %p272 = scmp.ne.s32.totalorder %s257, %s271
      %p273 = scmp.eq.s32.totalorder %s37, 0
      %p274 = por %p272, %p273
      %s276 = sadd.s32 %s275, 1
      %p279 = scmp.eq.s32.totalorder %s31, 1
      %p280 = scmp.ne.s32.totalorder %s275, %s277
      %p281 = scmp.eq.s32.totalorder %s31, 0
      %p282 = por %p280, %p281
      %p283 = scmp.ne.s32.totalorder %s275, %s277
      %p284 = scmp.eq.s32.totalorder %s36, 1
      %p285 = por %p283, %p284
      %p286 = scmp.ne.s32.totalorder %s277, %s278
      %p287 = scmp.eq.s32.totalorder %s36, 0
      %p288 = por %p286, %p287
      %p289 = scmp.ne.s32.totalorder %s277, %s278
      %p290 = scmp.eq.s32.totalorder %s37, 1
      %p291 = por %p289, %p290
      %p293 = scmp.ne.s32.totalorder %s278, %s292
      %p294 = scmp.eq.s32.totalorder %s37, 0
      %p295 = por %p293, %p294
      %s297 = sadd.s32 %s296, 1
      %p300 = scmp.eq.s32.totalorder %s31, 1
      %p301 = scmp.ne.s32.totalorder %s296, %s298
      %p302 = scmp.eq.s32.totalorder %s31, 0
      %p303 = por %p301, %p302
      %p304 = scmp.ne.s32.totalorder %s296, %s298
      %p305 = scmp.eq.s32.totalorder %s36, 1
      %p306 = por %p304, %p305
      %p307 = scmp.ne.s32.totalorder %s298, %s299
      %p308 = scmp.eq.s32.totalorder %s36, 0
      %p309 = por %p307, %p308
      %p310 = scmp.ne.s32.totalorder %s298, %s299
      %p311 = scmp.eq.s32.totalorder %s37, 1
      %p312 = por %p310, %p311
      %p314 = scmp.ne.s32.totalorder %s299, %s313
      %p315 = scmp.eq.s32.totalorder %s37, 0
      %p316 = por %p314, %p315
      %s318 = sadd.s32 %s317, 1
      %p321 = scmp.eq.s32.totalorder %s31, 1
      %p322 = scmp.ne.s32.totalorder %s317, %s319
      %p323 = scmp.eq.s32.totalorder %s31, 0
      %p324 = por %p322, %p323
      %p325 = scmp.ne.s32.totalorder %s317, %s319
      %p326 = scmp.eq.s32.totalorder %s36, 1
      %p327 = por %p325, %p326
      %p328 = scmp.ne.s32.totalorder %s319, %s320
      %p329 = scmp.eq.s32.totalorder %s36, 0
      %p330 = por %p328, %p329
      %p331 = scmp.ne.s32.totalorder %s319, %s320
      %p332 = scmp.eq.s32.totalorder %s37, 1
      %p333 = por %p331, %p332
      %p335 = scmp.ne.s32.totalorder %s320, %s334
      %p336 = scmp.eq.s32.totalorder %s37, 0
      %p337 = por %p335, %p336
      %s339 = sadd.s32 %s338, 1
      %p342 = scmp.eq.s32.totalorder %s31, 1
      %p343 = scmp.ne.s32.totalorder %s338, %s340
      %p344 = scmp.eq.s32.totalorder %s31, 0
      %p345 = por %p343, %p344
      %p346 = scmp.ne.s32.totalorder %s338, %s340
      %p347 = scmp.eq.s32.totalorder %s36, 1
      %p348 = por %p346, %p347
      %p349 = scmp.ne.s32.totalorder %s340, %s341
      %p350 = scmp.eq.s32.totalorder %s36, 0
      %p351 = por %p349, %p350
      %p352 = scmp.ne.s32.totalorder %s340, %s341
      %p353 = scmp.eq.s32.totalorder %s37, 1
      %p354 = por %p352, %p353
      %p356 = scmp.ne.s32.totalorder %s341, %s355
      %p357 = scmp.eq.s32.totalorder %s37, 0
      %p358 = por %p356, %p357
      %s360 = sadd.s32 %s359, 1
      %p363 = scmp.eq.s32.totalorder %s31, 1
      %p364 = scmp.ne.s32.totalorder %s359, %s361
      %p365 = scmp.eq.s32.totalorder %s31, 0
      %p366 = por %p364, %p365
      %p367 = scmp.ne.s32.totalorder %s359, %s361
      %p368 = scmp.eq.s32.totalorder %s36, 1
      %p369 = por %p367, %p368
      %p370 = scmp.ne.s32.totalorder %s361, %s362
      %p371 = scmp.eq.s32.totalorder %s36, 0
      %p372 = por %p370, %p371
      %p373 = scmp.ne.s32.totalorder %s361, %s362
      %p374 = scmp.eq.s32.totalorder %s37, 1
      %p375 = por %p373, %p374
      %p377 = scmp.ne.s32.totalorder %s362, %s376
      %p378 = scmp.eq.s32.totalorder %s37, 0
      %p379 = por %p377, %p378
      %s381 = sadd.s32 %s380, 1
      %p384 = scmp.eq.s32.totalorder %s31, 1
      %p385 = scmp.ne.s32.totalorder %s380, %s382
      %p386 = scmp.eq.s32.totalorder %s31, 0
      %p387 = por %p385, %p386
      %p388 = scmp.ne.s32.totalorder %s380, %s382
      %p389 = scmp.eq.s32.totalorder %s36, 1
      %p390 = por %p388, %p389
      %p391 = scmp.ne.s32.totalorder %s382, %s383
      %p392 = scmp.eq.s32.totalorder %s36, 0
      %p393 = por %p391, %p392
      %p394 = scmp.ne.s32.totalorder %s382, %s383
      %p395 = scmp.eq.s32.totalorder %s37, 1
      %p396 = por %p394, %p395
      %p398 = scmp.ne.s32.totalorder %s383, %s397
      %p399 = scmp.eq.s32.totalorder %s37, 0
      %p400 = por %p398, %p399
      %s402 = sadd.s32 %s401, 1
      %p405 = scmp.eq.s32.totalorder %s31, 1
      %p406 = scmp.ne.s32.totalorder %s401, %s403
      %p407 = scmp.eq.s32.totalorder %s31, 0
      %p408 = por %p406, %p407
      %p409 = scmp.ne.s32.totalorder %s401, %s403
      %p410 = scmp.eq.s32.totalorder %s36, 1
      %p411 = por %p409, %p410
      %p412 = scmp.ne.s32.totalorder %s403, %s404
      %p413 = scmp.eq.s32.totalorder %s36, 0
      %p414 = por %p412, %p413
      %p415 = scmp.ne.s32.totalorder %s403, %s404
      %p416 = scmp.eq.s32.totalorder %s37, 1
      %p417 = por %p415, %p416
      %p419 = scmp.ne.s32.totalorder %s404, %s418
      %p420 = scmp.eq.s32.totalorder %s37, 0
      %p421 = por %p419, %p420
      %s422 = ssub.s32 %s31, %s38
      %p423 = scmp.eq.s32.totalorder %s422, 0
      %s425 = sadd.s32 %s424, 1
      %s426 = scalar_select %p423, %s424, %s425
      %p429 = pneg %p423
      %p430 = scmp.eq.s32.totalorder %s31, 1
      %p431 = por %p429, %p430
      %p432 = scmp.ne.s32.totalorder %s424, %s427
      %p433 = scmp.eq.s32.totalorder %s31, 0
      %p434 = por %p432, %p433
      %p435 = scmp.ne.s32.totalorder %s424, %s427
      %p436 = scmp.eq.s32.totalorder %s36, 1
      %p437 = por %p435, %p436
      %p438 = scmp.ne.s32.totalorder %s427, %s428
      %p439 = scmp.eq.s32.totalorder %s36, 0
      %p440 = por %p438, %p439
      %p441 = scmp.ne.s32.totalorder %s427, %s428
      %p442 = scmp.eq.s32.totalorder %s37, 1
      %p443 = por %p441, %p442
      %p445 = scmp.ne.s32.totalorder %s428, %s444
      %p446 = scmp.eq.s32.totalorder %s37, 0
      %p447 = por %p445, %p446
      %p448 = scmp.le.s32.totalorder 1, %s31
      %p449 = scmp.lt.s32.totalorder %s31, 3
      %p450 = pnand %p448, %p449
      %p451 = pneg %p450
      // Predicated region
      $region9: #{tpu_custom_call.1} parent=5 // pred_check
        _
      $region10: #{tpu_custom_call.1} parent=5 // pred_check_branch
        %453 = sbr.rel (%p450) target = $region12
      $region11: #{tpu_custom_call.1} parent=5 // pred_region
        %s454 = ssub.s32 %s31, 1
        // Predicated region
        $region13: #{tpu_custom_call.1} parent=11 // pred_check
          %p455 = pneg %p78
        $region14: #{tpu_custom_call.1} parent=11 // pred_check_branch
          %457 = sbr.rel (%p455) target = $region16
        $region15: #{tpu_custom_call.1} parent=11 // pred_region
          %s459 = ssub.s32 128, 128
          %460 = vsyncadd [#allocation6], %s459
          %s462 = sshll.u32 [#allocation5], 4
          %s463 = int_to_ptr.vmem [resolvable:$true] %s462
          %465 = dma.hbm_to_vmem [thread:$0]  %s1, 128, %s463, [#allocation6]
        $region16: #{tpu_custom_call.1} parent=11 // pred_fallthru
          _
        // Predicated region
        $region17: #{tpu_custom_call.1} parent=11 // pred_check
          %p466 = pneg %p99
        $region18: #{tpu_custom_call.1} parent=11 // pred_check_branch
          %468 = sbr.rel (%p466) target = $region20
        $region19: #{tpu_custom_call.1} parent=11 // pred_region
          _
        $region20: #{tpu_custom_call.1} parent=11 // pred_fallthru
          _
        // Predicated region
        $region21: #{tpu_custom_call.1} parent=11 // pred_check
          %p469 = pneg %p120
        $region22: #{tpu_custom_call.1} parent=11 // pred_check_branch
          %471 = sbr.rel (%p469) target = $region24
        $region23: #{tpu_custom_call.1} parent=11 // pred_region
          _
        $region24: #{tpu_custom_call.1} parent=11 // pred_fallthru
          _
        // Predicated region
        $region25: #{tpu_custom_call.1} parent=11 // pred_check
          %p472 = pneg %p141
        $region26: #{tpu_custom_call.1} parent=11 // pred_check_branch
          %474 = sbr.rel (%p472) target = $region28
        $region27: #{tpu_custom_call.1} parent=11 // pred_region
          _
        $region28: #{tpu_custom_call.1} parent=11 // pred_fallthru
          _
        // Predicated region
        $region29: #{tpu_custom_call.1} parent=11 // pred_check
          %p475 = pneg %p162
        $region30: #{tpu_custom_call.1} parent=11 // pred_check_branch
          %477 = sbr.rel (%p475) target = $region32
        $region31: #{tpu_custom_call.1} parent=11 // pred_region
          _
        $region32: #{tpu_custom_call.1} parent=11 // pred_fallthru
          _
        // Predicated region
        $region33: #{tpu_custom_call.1} parent=11 // pred_check
          %p478 = pneg %p183
        $region34: #{tpu_custom_call.1} parent=11 // pred_check_branch
          %480 = sbr.rel (%p478) target = $region36
        $region35: #{tpu_custom_call.1} parent=11 // pred_region
          _
        $region36: #{tpu_custom_call.1} parent=11 // pred_fallthru
          _
        // Predicated region
        $region37: #{tpu_custom_call.1} parent=11 // pred_check
          %p481 = pneg %p204
        $region38: #{tpu_custom_call.1} parent=11 // pred_check_branch
          %483 = sbr.rel (%p481) target = $region40
        $region39: #{tpu_custom_call.1} parent=11 // pred_region
          _
        $region40: #{tpu_custom_call.1} parent=11 // pred_fallthru
          _
        // Predicated region
        $region41: #{tpu_custom_call.1} parent=11 // pred_check
          %p484 = pneg %p225
        $region42: #{tpu_custom_call.1} parent=11 // pred_check_branch
          %486 = sbr.rel (%p484) target = $region44
        $region43: #{tpu_custom_call.1} parent=11 // pred_region
          _
        $region44: #{tpu_custom_call.1} parent=11 // pred_fallthru
          _
        // Predicated region
        $region45: #{tpu_custom_call.1} parent=11 // pred_check
          %p487 = pneg %p246
        $region46: #{tpu_custom_call.1} parent=11 // pred_check_branch
          %489 = sbr.rel (%p487) target = $region48
        $region47: #{tpu_custom_call.1} parent=11 // pred_region
          _
        $region48: #{tpu_custom_call.1} parent=11 // pred_fallthru
          _
        // Predicated region
        $region49: #{tpu_custom_call.1} parent=11 // pred_check
          %p490 = pneg %p267
        $region50: #{tpu_custom_call.1} parent=11 // pred_check_branch
          %492 = sbr.rel (%p490) target = $region52
        $region51: #{tpu_custom_call.1} parent=11 // pred_region
          _
        $region52: #{tpu_custom_call.1} parent=11 // pred_fallthru
          _
        // Predicated region
        $region53: #{tpu_custom_call.1} parent=11 // pred_check
          %p493 = pneg %p288
        $region54: #{tpu_custom_call.1} parent=11 // pred_check_branch
          %495 = sbr.rel (%p493) target = $region56
        $region55: #{tpu_custom_call.1} parent=11 // pred_region
          _
        $region56: #{tpu_custom_call.1} parent=11 // pred_fallthru
          _
        // Predicated region
        $region57: #{tpu_custom_call.1} parent=11 // pred_check
          %p496 = pneg %p309
        $region58: #{tpu_custom_call.1} parent=11 // pred_check_branch
          %498 = sbr.rel (%p496) target = $region60
        $region59: #{tpu_custom_call.1} parent=11 // pred_region
          _
        $region60: #{tpu_custom_call.1} parent=11 // pred_fallthru
          _
        // Predicated region
        $region61: #{tpu_custom_call.1} parent=11 // pred_check
          %p499 = pneg %p330
        $region62: #{tpu_custom_call.1} parent=11 // pred_check_branch
          %501 = sbr.rel (%p499) target = $region64
        $region63: #{tpu_custom_call.1} parent=11 // pred_region
          _
        $region64: #{tpu_custom_call.1} parent=11 // pred_fallthru
          _
        // Predicated region
        $region65: #{tpu_custom_call.1} parent=11 // pred_check
          %p502 = pneg %p351
        $region66: #{tpu_custom_call.1} parent=11 // pred_check_branch
          %504 = sbr.rel (%p502) target = $region68
        $region67: #{tpu_custom_call.1} parent=11 // pred_region
          _
        $region68: #{tpu_custom_call.1} parent=11 // pred_fallthru
          _
        // Predicated region
        $region69: #{tpu_custom_call.1} parent=11 // pred_check
          %p505 = pneg %p372
        $region70: #{tpu_custom_call.1} parent=11 // pred_check_branch
          %507 = sbr.rel (%p505) target = $region72
        $region71: #{tpu_custom_call.1} parent=11 // pred_region
          _
        $region72: #{tpu_custom_call.1} parent=11 // pred_fallthru
          _
        // Predicated region
        $region73: #{tpu_custom_call.1} parent=11 // pred_check
          %p508 = pneg %p393
        $region74: #{tpu_custom_call.1} parent=11 // pred_check_branch
          %510 = sbr.rel (%p508) target = $region76
        $region75: #{tpu_custom_call.1} parent=11 // pred_region
          _
        $region76: #{tpu_custom_call.1} parent=11 // pred_fallthru
          _
        // Predicated region
        $region77: #{tpu_custom_call.1} parent=11 // pred_check
          %p511 = pneg %p414
        $region78: #{tpu_custom_call.1} parent=11 // pred_check_branch
          %513 = sbr.rel (%p511) target = $region80
        $region79: #{tpu_custom_call.1} parent=11 // pred_region
          _
        $region80: #{tpu_custom_call.1} parent=11 // pred_fallthru
          _
      $region12: #{tpu_custom_call.1} parent=5 // pred_fallthru
        _
      %p514 = scmp.lt.s32.totalorder %s31, 2
      // Predicated region
      $region81: #{tpu_custom_call.1} parent=5 // pred_check
        %p515 = pneg %p514
      $region82: #{tpu_custom_call.1} parent=5 // pred_check_branch
        %517 = sbr.rel (%p515) target = $region84
      $region83: #{tpu_custom_call.1} parent=5 // pred_region
        // Predicated region
        $region85: #{tpu_custom_call.1} parent=83 // pred_check
          %p518 = pneg %p51
        $region86: #{tpu_custom_call.1} parent=83 // pred_check_branch
          %520 = sbr.rel (%p518) target = $region88
        $region87: #{tpu_custom_call.1} parent=83 // pred_region
          %s521 = sand.u32 %s41, 1
          %s522 = scalar_lea.sflag [#allocation3], %s521
          %s523 = sand.u32 %s41, 1
          %s524 = smul.addr %s523, 8
          %s525 = scalar_lea.vmem [#allocation2], %s524
          %s527 = ssub.s32 128, 128
          %528 = vsyncadd %s522, %s527
          %s529 = smul.addr %s31, 128
          %s530 = scalar_lea.hbm %s0, %s529
          %s532 = sshll.u32 %s525, 4
          %s533 = int_to_ptr.vmem [resolvable:$true] %s532
          %535 = dma.hbm_to_vmem [thread:$0]  %s530, 128, %s533, %s522
        $region88: #{tpu_custom_call.1} parent=83 // pred_fallthru
          _
      $region84: #{tpu_custom_call.1} parent=5 // pred_fallthru
        _
      %p536 = scmp.le.s32.totalorder 1, %s31
      %p537 = scmp.lt.s32.totalorder %s31, 3
      %p538 = pnand %p536, %p537
      %p539 = pneg %p538
      // Predicated region
      $region89: #{tpu_custom_call.1} parent=5 // pred_check
        _
      $region90: #{tpu_custom_call.1} parent=5 // pred_check_branch
        %541 = sbr.rel (%p538) target = $region92
      $region91: #{tpu_custom_call.1} parent=5 // pred_region
        %s542 = ssub.s32 %s31, 1
        %s543 = sand.u32 %s44, 1
        %s544 = scalar_lea.sflag [#allocation3], %s543
        %s545 = sand.u32 %s44, 1
        %s546 = smul.addr %s545, 8
        %s547 = scalar_lea.vmem [#allocation2], %s546
        // Predicated region
        $region93: #{tpu_custom_call.1} parent=91 // pred_check
          %p548 = pneg %p57
        $region94: #{tpu_custom_call.1} parent=91 // pred_check_branch
          %550 = sbr.rel (%p548) target = $region96
        $region95: #{tpu_custom_call.1} parent=91 // pred_region
          %551 = dma.done %s544, 128
        $region96: #{tpu_custom_call.1} parent=91 // pred_fallthru
          _
        // Predicated region
        $region97: #{tpu_custom_call.1} parent=91 // pred_check
          %p552 = pneg %p78
        $region98: #{tpu_custom_call.1} parent=91 // pred_check_branch
          %554 = sbr.rel (%p552) target = $region100
        $region99: #{tpu_custom_call.1} parent=91 // pred_region
          %555 = dma.done [#allocation6], 128
        $region100: #{tpu_custom_call.1} parent=91 // pred_fallthru
          _
        %s556 = sand.u32 %s44, 1
        %s557 = scalar_lea.sflag [#allocation3], %s556
        %s558 = sand.u32 %s44, 1
        %s559 = smul.addr %s558, 8
        %s560 = scalar_lea.vmem [#allocation2], %s559
        %p561 = pneg %p57
        %p562 = pneg %p54
        %p563 = pneg %p78
        %p564 = pneg %p75
        %p565 = pneg %p99
        %p566 = pneg %p96
        %p567 = pneg %p120
        %p568 = pneg %p117
        %p569 = pneg %p141
        %p570 = pneg %p138
        %p571 = pneg %p162
        %p572 = pneg %p159
        %p573 = pneg %p183
        %p574 = pneg %p180
        %p575 = pneg %p204
        %p576 = pneg %p201
        %p577 = pneg %p225
        %p578 = pneg %p222
        %p579 = pneg %p246
        %p580 = pneg %p243
        %p581 = pneg %p267
        %p582 = pneg %p264
        %p583 = pneg %p288
        %p584 = pneg %p285
        %p585 = pneg %p309
        %p586 = pneg %p306
        %p587 = pneg %p330
        %p588 = pneg %p327
        %p589 = pneg %p351
        %p590 = pneg %p348
        %p591 = pneg %p372
        %p592 = pneg %p369
        %p593 = pneg %p393
        %p594 = pneg %p390
        %p595 = pneg %p414
        %p596 = pneg %p411
        %p597 = pneg %p440
        %p598 = pneg %p437
        %s599 = sand.u32 %s427, 1
        %s600 = scalar_lea.sflag [#allocation4], %s599
        %s601 = sand.u32 %s427, 1
        %s602 = smul.addr %s601, 8
        %s603 = scalar_lea.vmem [#allocation7], %s602
        %v604 = vld [vmem:[%s547] sm:$0xff]
        %v605 = vld [vmem:[#allocation5] sm:$0xff]
        %v606 = vld [vmem:[%s2] sm:$0x1]
        %v607 = vld [vmem:[%s3] sm:$0x1]
        %vm608 = vcmask 261120
        %v609 = vsel %vm608, %v604, 0.0
        %610 = vadd.xlane.f32.xlu0 %v609
        %v611 = vpop.xlane.xlu0 %610
        %v612 = vrcp.pop 32.0
        %v613 = vmul.f32 %v611, %v612
        %v614 = vsub.f32 %v604, %v613
        %v615 = vmul.f32 %v614, %v614
        %v616 = vsel %vm608, %v615, 0.0
        %617 = vadd.xlane.f32.xlu0 %v616
        %v618 = vpop.xlane.xlu0 %617
        %v619 = vmul.f32 %v618, %v612
        %v620 = vadd.f32 %v619, 1e-05
        %v621 = vrsqrt.pop %v620
        %v622 = vmul.f32 %v614, %v621
        %v624 = vlaneseq
        %v625 = vshrl.u32 %v624, 7
        %v626 = vsub.s32 0, %v625
        %v627 = vrot.slane %v606, %v626
        %v629 = vmul.f32 %v622, %v627
        %v631 = vlaneseq
        %v632 = vshrl.u32 %v631, 7
        %v633 = vsub.s32 0, %v632
        %v634 = vrot.slane %v607, %v633
        %v636 = vadd.f32 %v629, %v634
        %v637 = vld [vmem:[%s6] sm:$0xff]
        %v638 = vld [vmem:[%s6 + $0x8] sm:$0xff]
        %v639 = vld [vmem:[%s6 + $0x10] sm:$0xff]
        %v640 = vld [vmem:[%s6 + $0x18] sm:$0xff]
        %v641 = vld [vmem:[%s7] sm:$0x1]
        %v643 = vlaneseq
        %v644 = vshrl.u32 %v643, 7
        %v645 = vsub.s32 0, %v644
        %v646 = vrot.slane %v641, %v645
        %v649 = vsel %vm608, %v636, 0
        %651 = vmatprep.subr.mxu0 0.0
        %652 = vmatpush1.msra.mxu0 0.0
        %653 = vmatprep.subr.mxu0 0.0
        %654 = vmatpush1.msra.mxu0 0.0
        %655 = vmatprep.subr.mxu0 0.0
        %656 = vmatpush1.msra.mxu0 0.0
        %657 = vmatprep.subr.mxu0 0.0
        %658 = vmatpush1.msra.mxu0 0.0
        %659 = vmatprep.subr.mxu0 0.0
        %660 = vmatpush1.msra.mxu0 0.0
        %661 = vmatprep.subr.mxu0 0.0
        %662 = vmatpush1.msra.mxu0 0.0
        %663 = vmatprep.subr.mxu0 0.0
        %664 = vmatpush1.msra.mxu0 0.0
        %665 = vmatprep.subr.mxu0 0.0
        %666 = vmatpush1.msra.mxu0 0.0
        %667 = vmatprep.subr.mxu0 0.0
        %668 = vmatpush1.msra.mxu0 0.0
        %669 = vmatprep.subr.mxu0 0.0
        %670 = vmatpush1.msra.mxu0 0.0
        %671 = vmatprep.subr.mxu0 0.0
        %672 = vmatpush1.msra.mxu0 0.0
        %673 = vmatprep.subr.mxu0 0.0
        %674 = vmatpush1.msra.mxu0 0.0
        %675 = vmatprep.subr.mxu0 0.0
        %676 = vmatpush1.msra.mxu0 %v640
        %677 = vmatprep.subr.mxu0 0.0
        %678 = vmatpush1.msra.mxu0 %v639
        %679 = vmatprep.subr.mxu0 0.0
        %680 = vmatpush1.msra.mxu0 %v638
        %681 = vmatprep.subr.mxu0 0.0
        %682 = vmatpush1.msra.mxu0 %v637
        %683 = vmatprep.subr.mxu0 0.0
        %684 = vmatpush2.msra.mxu0 0.0
        %685 = vmatprep.subr.mxu0 0.0
        %686 = vmatpush2.msra.mxu0 0.0
        %687 = vmatprep.subr.mxu0 0.0
        %688 = vmatpush2.msra.mxu0 0.0
        %689 = vmatprep.subr.mxu0 0.0
        %690 = vmatpush2.msra.mxu0 0.0
        %691 = vmatprep.subr.mxu0 0.0
        %692 = vmatpush2.msra.mxu0 0.0
        %693 = vmatprep.subr.mxu0 0.0
        %694 = vmatpush2.msra.mxu0 0.0
        %695 = vmatprep.subr.mxu0 0.0
        %696 = vmatpush2.msra.mxu0 0.0
        %697 = vmatprep.subr.mxu0 0.0
        %698 = vmatpush2.msra.mxu0 0.0
        %699 = vmatprep.subr.mxu0 0.0
        %700 = vmatpush2.msra.mxu0 0.0
        %701 = vmatprep.subr.mxu0 0.0
        %702 = vmatpush2.msra.mxu0 0.0
        %703 = vmatprep.subr.mxu0 0.0
        %704 = vmatpush2.msra.mxu0 0.0
        %705 = vmatprep.subr.mxu0 0.0
        %706 = vmatpush2.msra.mxu0 0.0
        %707 = vmatprep.subr.mxu0 0.0
        %708 = vmatpush2.msra.mxu0 0.0
        %709 = vmatprep.subr.mxu0 0.0
        %710 = vmatpush2.msra.mxu0 0.0
        %711 = vmatprep.subr.mxu0 0.0
        %712 = vmatpush2.msra.mxu0 0.0
        %713 = vmatprep.subr.mxu0 0.0
        %714 = vmatpush2.msra.mxu0 0.0
        %715 = vmatprep.mubr.f32.mxu0 0.0
        %716 = vmatmul.mubr.f32.gmra.mxu0 %v649
        %v717 = vpop.f32.mrf.mxu0
        %v718 = vadd.f32 %v646, %v717
        %v719 = vpop.f32.mrf.mxu0
        %720 = vdwg.mxu0
        %v721 = vld [vmem:[%s8] sm:$0xff]
        %v722 = vld [vmem:[%s8 + $0x8] sm:$0xff]
        %v723 = vld [vmem:[%s8 + $0x10] sm:$0xff]
        %v724 = vld [vmem:[%s8 + $0x18] sm:$0xff]
        %v725 = vld [vmem:[%s9] sm:$0x1]
        %v727 = vlaneseq
        %v728 = vshrl.u32 %v727, 7
        %v729 = vsub.s32 0, %v728
        %v730 = vrot.slane %v725, %v729
        %732 = vmatprep.subr.mxu0 0.0
        %733 = vmatpush1.msra.mxu0 0.0
        %734 = vmatprep.subr.mxu0 0.0
        %735 = vmatpush1.msra.mxu0 0.0
        %736 = vmatprep.subr.mxu0 0.0
        %737 = vmatpush1.msra.mxu0 0.0
        %738 = vmatprep.subr.mxu0 0.0
        %739 = vmatpush1.msra.mxu0 0.0
        %740 = vmatprep.subr.mxu0 0.0
        %741 = vmatpush1.msra.mxu0 0.0
        %742 = vmatprep.subr.mxu0 0.0
        %743 = vmatpush1.msra.mxu0 0.0
        %744 = vmatprep.subr.mxu0 0.0
        %745 = vmatpush1.msra.mxu0 0.0
        %746 = vmatprep.subr.mxu0 0.0
        %747 = vmatpush1.msra.mxu0 0.0
        %748 = vmatprep.subr.mxu0 0.0
        %749 = vmatpush1.msra.mxu0 0.0
        %750 = vmatprep.subr.mxu0 0.0
        %751 = vmatpush1.msra.mxu0 0.0
        %752 = vmatprep.subr.mxu0 0.0
        %753 = vmatpush1.msra.mxu0 0.0
        %754 = vmatprep.subr.mxu0 0.0
        %755 = vmatpush1.msra.mxu0 0.0
        %756 = vmatprep.subr.mxu0 0.0
        %757 = vmatpush1.msra.mxu0 %v724
        %758 = vmatprep.subr.mxu0 0.0
        %759 = vmatpush1.msra.mxu0 %v723
        %760 = vmatprep.subr.mxu0 0.0
        %761 = vmatpush1.msra.mxu0 %v722
        %762 = vmatprep.subr.mxu0 0.0
        %763 = vmatpush1.msra.mxu0 %v721
        %764 = vmatprep.subr.mxu0 0.0
        %765 = vmatpush2.msra.mxu0 0.0
        %766 = vmatprep.subr.mxu0 0.0
        %767 = vmatpush2.msra.mxu0 0.0
        %768 = vmatprep.subr.mxu0 0.0
        %769 = vmatpush2.msra.mxu0 0.0
        %770 = vmatprep.subr.mxu0 0.0
        %771 = vmatpush2.msra.mxu0 0.0
        %772 = vmatprep.subr.mxu0 0.0
        %773 = vmatpush2.msra.mxu0 0.0
        %774 = vmatprep.subr.mxu0 0.0
        %775 = vmatpush2.msra.mxu0 0.0
        %776 = vmatprep.subr.mxu0 0.0
        %777 = vmatpush2.msra.mxu0 0.0
        %778 = vmatprep.subr.mxu0 0.0
        %779 = vmatpush2.msra.mxu0 0.0
        %780 = vmatprep.subr.mxu0 0.0
        %781 = vmatpush2.msra.mxu0 0.0
        %782 = vmatprep.subr.mxu0 0.0
        %783 = vmatpush2.msra.mxu0 0.0
        %784 = vmatprep.subr.mxu0 0.0
        %785 = vmatpush2.msra.mxu0 0.0
        %786 = vmatprep.subr.mxu0 0.0
        %787 = vmatpush2.msra.mxu0 0.0
        %788 = vmatprep.subr.mxu0 0.0
        %789 = vmatpush2.msra.mxu0 0.0
        %790 = vmatprep.subr.mxu0 0.0
        %791 = vmatpush2.msra.mxu0 0.0
        %792 = vmatprep.subr.mxu0 0.0
        %793 = vmatpush2.msra.mxu0 0.0
        %794 = vmatprep.subr.mxu0 0.0
        %795 = vmatpush2.msra.mxu0 0.0
        %796 = vmatprep.mubr.f32.mxu0 0.0
        %797 = vmatmul.mubr.f32.gmra.mxu0 %v649
        %v798 = vpop.f32.mrf.mxu0
        %v799 = vadd.f32 %v730, %v798
        %v800 = vpop.f32.mrf.mxu0
        %801 = vdwg.mxu0
        %v802 = vld [vmem:[%s10] sm:$0xff]
        %v803 = vld [vmem:[%s10 + $0x8] sm:$0xff]
        %v804 = vld [vmem:[%s10 + $0x10] sm:$0xff]
        %v805 = vld [vmem:[%s10 + $0x18] sm:$0xff]
        %v806 = vld [vmem:[%s11] sm:$0x1]
        %v808 = vlaneseq
        %v809 = vshrl.u32 %v808, 7
        %v810 = vsub.s32 0, %v809
        %v811 = vrot.slane %v806, %v810
        %813 = vmatprep.subr.mxu0 0.0
        %814 = vmatpush1.msra.mxu0 0.0
        %815 = vmatprep.subr.mxu0 0.0
        %816 = vmatpush1.msra.mxu0 0.0
        %817 = vmatprep.subr.mxu0 0.0
        %818 = vmatpush1.msra.mxu0 0.0
        %819 = vmatprep.subr.mxu0 0.0
        %820 = vmatpush1.msra.mxu0 0.0
        %821 = vmatprep.subr.mxu0 0.0
        %822 = vmatpush1.msra.mxu0 0.0
        %823 = vmatprep.subr.mxu0 0.0
        %824 = vmatpush1.msra.mxu0 0.0
        %825 = vmatprep.subr.mxu0 0.0
        %826 = vmatpush1.msra.mxu0 0.0
        %827 = vmatprep.subr.mxu0 0.0
        %828 = vmatpush1.msra.mxu0 0.0
        %829 = vmatprep.subr.mxu0 0.0
        %830 = vmatpush1.msra.mxu0 0.0
        %831 = vmatprep.subr.mxu0 0.0
        %832 = vmatpush1.msra.mxu0 0.0
        %833 = vmatprep.subr.mxu0 0.0
        %834 = vmatpush1.msra.mxu0 0.0
        %835 = vmatprep.subr.mxu0 0.0
        %836 = vmatpush1.msra.mxu0 0.0
        %837 = vmatprep.subr.mxu0 0.0
        %838 = vmatpush1.msra.mxu0 %v805
        %839 = vmatprep.subr.mxu0 0.0
        %840 = vmatpush1.msra.mxu0 %v804
        %841 = vmatprep.subr.mxu0 0.0
        %842 = vmatpush1.msra.mxu0 %v803
        %843 = vmatprep.subr.mxu0 0.0
        %844 = vmatpush1.msra.mxu0 %v802
        %845 = vmatprep.subr.mxu0 0.0
        %846 = vmatpush2.msra.mxu0 0.0
        %847 = vmatprep.subr.mxu0 0.0
        %848 = vmatpush2.msra.mxu0 0.0
        %849 = vmatprep.subr.mxu0 0.0
        %850 = vmatpush2.msra.mxu0 0.0
        %851 = vmatprep.subr.mxu0 0.0
        %852 = vmatpush2.msra.mxu0 0.0
        %853 = vmatprep.subr.mxu0 0.0
        %854 = vmatpush2.msra.mxu0 0.0
        %855 = vmatprep.subr.mxu0 0.0
        %856 = vmatpush2.msra.mxu0 0.0
        %857 = vmatprep.subr.mxu0 0.0
        %858 = vmatpush2.msra.mxu0 0.0
        %859 = vmatprep.subr.mxu0 0.0
        %860 = vmatpush2.msra.mxu0 0.0
        %861 = vmatprep.subr.mxu0 0.0
        %862 = vmatpush2.msra.mxu0 0.0
        %863 = vmatprep.subr.mxu0 0.0
        %864 = vmatpush2.msra.mxu0 0.0
        %865 = vmatprep.subr.mxu0 0.0
        %866 = vmatpush2.msra.mxu0 0.0
        %867 = vmatprep.subr.mxu0 0.0
        %868 = vmatpush2.msra.mxu0 0.0
        %869 = vmatprep.subr.mxu0 0.0
        %870 = vmatpush2.msra.mxu0 0.0
        %871 = vmatprep.subr.mxu0 0.0
        %872 = vmatpush2.msra.mxu0 0.0
        %873 = vmatprep.subr.mxu0 0.0
        %874 = vmatpush2.msra.mxu0 0.0
        %875 = vmatprep.subr.mxu0 0.0
        %876 = vmatpush2.msra.mxu0 0.0
        %877 = vmatprep.mubr.f32.mxu0 0.0
        %878 = vmatmul.mubr.f32.gmra.mxu0 %v649
        %v879 = vpop.f32.mrf.mxu0
        %v880 = vadd.f32 %v811, %v879
        %v881 = vpop.f32.mrf.mxu0
        %882 = vdwg.mxu0
        %884 = vrot.lane.b32.xlu0 %v718, 120
        %v885 = vpop.permute.xlu0 %884
        %887 = vrot.lane.b32.xlu0 %v718, 112
        %v888 = vpop.permute.xlu0 %887
        %890 = vrot.lane.b32.xlu0 %v718, 104
        %v891 = vpop.permute.xlu0 %890
        %v893 = vcombine.low %v718, %v888
        %v894 = vcombine.high %v718, %v888
        %v896 = vunpack.c.l.s4 1983009808
        %v897 = vunpack.c.0.s8 %v896
        %v898 = vlaneseq
        %v899 = vshrl.u32 %v898, 7
        %v900 = vsub.s32 %v897, %v899
        %v901 = vrot.slane %v893, %v900
        %v903 = vunpack.c.l.s4 1983009808
        %v904 = vunpack.c.0.s8 %v903
        %v905 = vlaneseq
        %v906 = vshrl.u32 %v905, 7
        %v907 = vsub.s32 %v904, %v906
        %v908 = vrot.slane %v894, %v907
        %v909 = vcombine.low %v885, %v891
        %v910 = vcombine.high %v885, %v891
        %v912 = vunpack.c.l.s4 1983009808
        %v913 = vunpack.c.0.s8 %v912
        %v914 = vlaneseq
        %v915 = vshrl.u32 %v914, 7
        %v916 = vsub.s32 %v913, %v915
        %v917 = vrot.slane %v909, %v916
        %v919 = vunpack.c.l.s4 1983009808
        %v920 = vunpack.c.0.s8 %v919
        %v921 = vlaneseq
        %v922 = vshrl.u32 %v921, 7
        %v923 = vsub.s32 %v920, %v922
        %v924 = vrot.slane %v910, %v923
        %v925 = vcombine.low %v901, %v917
        %v926 = vcombine.high %v901, %v917
        %v928 = vunpack.c.l.s4 1934713408
        %v929 = vunpack.c.0.s8 %v928
        %v930 = vlaneseq
        %v931 = vshrl.u32 %v930, 7
        %v932 = vsub.s32 %v929, %v931
        %v933 = vrot.slane %v925, %v932
        %v935 = vunpack.c.l.s4 1934713408
        %v936 = vunpack.c.0.s8 %v935
        %v937 = vlaneseq
        %v938 = vshrl.u32 %v937, 7
        %v939 = vsub.s32 %v936, %v938
        %v940 = vrot.slane %v926, %v939
        %v941 = vcombine.low %v908, %v924
        %v942 = vcombine.high %v908, %v924
        %v944 = vunpack.c.l.s4 1934713408
        %v945 = vunpack.c.0.s8 %v944
        %v946 = vlaneseq
        %v947 = vshrl.u32 %v946, 7
        %v948 = vsub.s32 %v945, %v947
        %v949 = vrot.slane %v941, %v948
        %v951 = vunpack.c.l.s4 1934713408
        %v952 = vunpack.c.0.s8 %v951
        %v953 = vlaneseq
        %v954 = vshrl.u32 %v953, 7
        %v955 = vsub.s32 %v952, %v954
        %v956 = vrot.slane %v942, %v955
        %v957 = vcombine.high %v933, 0.0
        %v958 = vcombine.high %v940, 0.0
        %v959 = vcombine.high %v949, 0.0
        %v960 = vcombine.high %v956, 0.0
        %v961 = vcombine.low %v933, %v940
        %v963 = vunpack.c.l.s4 1983009808
        %v964 = vunpack.c.0.s8 %v963
        %v965 = vlaneseq
        %v966 = vshrl.u32 %v965, 7
        %v967 = vsub.s32 %v964, %v966
        %v968 = vrot.slane %v961, %v967
        %v969 = vcombine.low %v957, %v958
        %v971 = vunpack.c.l.s4 1983009808
        %v972 = vunpack.c.0.s8 %v971
        %v973 = vlaneseq
        %v974 = vshrl.u32 %v973, 7
        %v975 = vsub.s32 %v972, %v974
        %v976 = vrot.slane %v969, %v975
        %v977 = vcombine.low %v949, %v956
        %v979 = vunpack.c.l.s4 1983009808
        %v980 = vunpack.c.0.s8 %v979
        %v981 = vlaneseq
        %v982 = vshrl.u32 %v981, 7
        %v983 = vsub.s32 %v980, %v982
        %v984 = vrot.slane %v977, %v983
        %v985 = vcombine.low %v959, %v960
        %v987 = vunpack.c.l.s4 1983009808
        %v988 = vunpack.c.0.s8 %v987
        %v989 = vlaneseq
        %v990 = vshrl.u32 %v989, 7
        %v991 = vsub.s32 %v988, %v990
        %v992 = vrot.slane %v985, %v991
        %v993 = vcombine.low %v968, %v976
        %v994 = vcombine.high %v968, %v976
        %v996 = vunpack.c.l.s4 1934713408
        %v997 = vunpack.c.0.s8 %v996
        %v998 = vlaneseq
        %v999 = vshrl.u32 %v998, 7
        %v1000 = vsub.s32 %v997, %v999
        %v1001 = vrot.slane %v993, %v1000
        %v1003 = vunpack.c.l.s4 1934713408
        %v1004 = vunpack.c.0.s8 %v1003
        %v1005 = vlaneseq
        %v1006 = vshrl.u32 %v1005, 7
        %v1007 = vsub.s32 %v1004, %v1006
        %v1008 = vrot.slane %v994, %v1007
        %v1009 = vcombine.low %v984, %v992
        %v1010 = vcombine.high %v984, %v992
        %v1012 = vunpack.c.l.s4 1934713408
        %v1013 = vunpack.c.0.s8 %v1012
        %v1014 = vlaneseq
        %v1015 = vshrl.u32 %v1014, 7
        %v1016 = vsub.s32 %v1013, %v1015
        %v1017 = vrot.slane %v1009, %v1016
        %v1019 = vunpack.c.l.s4 1934713408
        %v1020 = vunpack.c.0.s8 %v1019
        %v1021 = vlaneseq
        %v1022 = vshrl.u32 %v1021, 7
        %v1023 = vsub.s32 %v1020, %v1022
        %v1024 = vrot.slane %v1010, %v1023
        %v1025 = vcombine.low %v1001, %v1017
        %v1026 = vcombine.high %v1001, %v1017
        %v1027 = vcombine.low %v1008, %v1024
        %v1028 = vcombine.high %v1008, %v1024
        %1030 = vrot.lane.b32.xlu0 %v799, 120
        %v1031 = vpop.permute.xlu0 %1030
        %1033 = vrot.lane.b32.xlu0 %v799, 112
        %v1034 = vpop.permute.xlu0 %1033
        %1036 = vrot.lane.b32.xlu0 %v799, 104
        %v1037 = vpop.permute.xlu0 %1036
        %v1039 = vcombine.low %v799, %v1034
        %v1040 = vcombine.high %v799, %v1034
        %v1042 = vunpack.c.l.s4 1983009808
        %v1043 = vunpack.c.0.s8 %v1042
        %v1044 = vlaneseq
        %v1045 = vshrl.u32 %v1044, 7
        %v1046 = vsub.s32 %v1043, %v1045
        %v1047 = vrot.slane %v1039, %v1046
        %v1049 = vunpack.c.l.s4 1983009808
        %v1050 = vunpack.c.0.s8 %v1049
        %v1051 = vlaneseq
        %v1052 = vshrl.u32 %v1051, 7
        %v1053 = vsub.s32 %v1050, %v1052
        %v1054 = vrot.slane %v1040, %v1053
        %v1055 = vcombine.low %v1031, %v1037
        %v1056 = vcombine.high %v1031, %v1037
        %v1058 = vunpack.c.l.s4 1983009808
        %v1059 = vunpack.c.0.s8 %v1058
        %v1060 = vlaneseq
        %v1061 = vshrl.u32 %v1060, 7
        %v1062 = vsub.s32 %v1059, %v1061
        %v1063 = vrot.slane %v1055, %v1062
        %v1065 = vunpack.c.l.s4 1983009808
        %v1066 = vunpack.c.0.s8 %v1065
        %v1067 = vlaneseq
        %v1068 = vshrl.u32 %v1067, 7
        %v1069 = vsub.s32 %v1066, %v1068
        %v1070 = vrot.slane %v1056, %v1069
        %v1071 = vcombine.low %v1047, %v1063
        %v1072 = vcombine.high %v1047, %v1063
        %v1074 = vunpack.c.l.s4 1934713408
        %v1075 = vunpack.c.0.s8 %v1074
        %v1076 = vlaneseq
        %v1077 = vshrl.u32 %v1076, 7
        %v1078 = vsub.s32 %v1075, %v1077
        %v1079 = vrot.slane %v1071, %v1078
        %v1081 = vunpack.c.l.s4 1934713408
        %v1082 = vunpack.c.0.s8 %v1081
        %v1083 = vlaneseq
        %v1084 = vshrl.u32 %v1083, 7
        %v1085 = vsub.s32 %v1082, %v1084
        %v1086 = vrot.slane %v1072, %v1085
        %v1087 = vcombine.low %v1054, %v1070
        %v1088 = vcombine.high %v1054, %v1070
        %v1090 = vunpack.c.l.s4 1934713408
        %v1091 = vunpack.c.0.s8 %v1090
        %v1092 = vlaneseq
        %v1093 = vshrl.u32 %v1092, 7
        %v1094 = vsub.s32 %v1091, %v1093
        %v1095 = vrot.slane %v1087, %v1094
        %v1097 = vunpack.c.l.s4 1934713408
        %v1098 = vunpack.c.0.s8 %v1097
        %v1099 = vlaneseq
        %v1100 = vshrl.u32 %v1099, 7
        %v1101 = vsub.s32 %v1098, %v1100
        %v1102 = vrot.slane %v1088, %v1101
        %v1103 = vcombine.high %v1079, 0.0
        %v1104 = vcombine.high %v1086, 0.0
        %v1105 = vcombine.high %v1095, 0.0
        %v1106 = vcombine.high %v1102, 0.0
        %v1107 = vcombine.low %v1079, %v1086
        %v1109 = vunpack.c.l.s4 1983009808
        %v1110 = vunpack.c.0.s8 %v1109
        %v1111 = vlaneseq
        %v1112 = vshrl.u32 %v1111, 7
        %v1113 = vsub.s32 %v1110, %v1112
        %v1114 = vrot.slane %v1107, %v1113
        %v1115 = vcombine.low %v1103, %v1104
        %v1117 = vunpack.c.l.s4 1983009808
        %v1118 = vunpack.c.0.s8 %v1117
        %v1119 = vlaneseq
        %v1120 = vshrl.u32 %v1119, 7
        %v1121 = vsub.s32 %v1118, %v1120
        %v1122 = vrot.slane %v1115, %v1121
        %v1123 = vcombine.low %v1095, %v1102
        %v1125 = vunpack.c.l.s4 1983009808
        %v1126 = vunpack.c.0.s8 %v1125
        %v1127 = vlaneseq
        %v1128 = vshrl.u32 %v1127, 7
        %v1129 = vsub.s32 %v1126, %v1128
        %v1130 = vrot.slane %v1123, %v1129
        %v1131 = vcombine.low %v1105, %v1106
        %v1133 = vunpack.c.l.s4 1983009808
        %v1134 = vunpack.c.0.s8 %v1133
        %v1135 = vlaneseq
        %v1136 = vshrl.u32 %v1135, 7
        %v1137 = vsub.s32 %v1134, %v1136
        %v1138 = vrot.slane %v1131, %v1137
        %v1139 = vcombine.low %v1114, %v1122
        %v1140 = vcombine.high %v1114, %v1122
        %v1142 = vunpack.c.l.s4 1934713408
        %v1143 = vunpack.c.0.s8 %v1142
        %v1144 = vlaneseq
        %v1145 = vshrl.u32 %v1144, 7
        %v1146 = vsub.s32 %v1143, %v1145
        %v1147 = vrot.slane %v1139, %v1146
        %v1149 = vunpack.c.l.s4 1934713408
        %v1150 = vunpack.c.0.s8 %v1149
        %v1151 = vlaneseq
        %v1152 = vshrl.u32 %v1151, 7
        %v1153 = vsub.s32 %v1150, %v1152
        %v1154 = vrot.slane %v1140, %v1153
        %v1155 = vcombine.low %v1130, %v1138
        %v1156 = vcombine.high %v1130, %v1138
        %v1158 = vunpack.c.l.s4 1934713408
        %v1159 = vunpack.c.0.s8 %v1158
        %v1160 = vlaneseq
        %v1161 = vshrl.u32 %v1160, 7
        %v1162 = vsub.s32 %v1159, %v1161
        %v1163 = vrot.slane %v1155, %v1162
        %v1165 = vunpack.c.l.s4 1934713408
        %v1166 = vunpack.c.0.s8 %v1165
        %v1167 = vlaneseq
        %v1168 = vshrl.u32 %v1167, 7
        %v1169 = vsub.s32 %v1166, %v1168
        %v1170 = vrot.slane %v1156, %v1169
        %v1171 = vcombine.low %v1147, %v1163
        %v1172 = vcombine.high %v1147, %v1163
        %v1173 = vcombine.low %v1154, %v1170
        %v1174 = vcombine.high %v1154, %v1170
        %1176 = vrot.lane.b32.xlu0 %v880, 120
        %v1177 = vpop.permute.xlu0 %1176
        %1179 = vrot.lane.b32.xlu0 %v880, 112
        %v1180 = vpop.permute.xlu0 %1179
        %1182 = vrot.lane.b32.xlu0 %v880, 104
        %v1183 = vpop.permute.xlu0 %1182
        %v1185 = vcombine.low %v880, %v1180
        %v1186 = vcombine.high %v880, %v1180
        %v1188 = vunpack.c.l.s4 1983009808
        %v1189 = vunpack.c.0.s8 %v1188
        %v1190 = vlaneseq
        %v1191 = vshrl.u32 %v1190, 7
        %v1192 = vsub.s32 %v1189, %v1191
        %v1193 = vrot.slane %v1185, %v1192
        %v1195 = vunpack.c.l.s4 1983009808
        %v1196 = vunpack.c.0.s8 %v1195
        %v1197 = vlaneseq
        %v1198 = vshrl.u32 %v1197, 7
        %v1199 = vsub.s32 %v1196, %v1198
        %v1200 = vrot.slane %v1186, %v1199
        %v1201 = vcombine.low %v1177, %v1183
        %v1202 = vcombine.high %v1177, %v1183
        %v1204 = vunpack.c.l.s4 1983009808
        %v1205 = vunpack.c.0.s8 %v1204
        %v1206 = vlaneseq
        %v1207 = vshrl.u32 %v1206, 7
        %v1208 = vsub.s32 %v1205, %v1207
        %v1209 = vrot.slane %v1201, %v1208
        %v1211 = vunpack.c.l.s4 1983009808
        %v1212 = vunpack.c.0.s8 %v1211
        %v1213 = vlaneseq
        %v1214 = vshrl.u32 %v1213, 7
        %v1215 = vsub.s32 %v1212, %v1214
        %v1216 = vrot.slane %v1202, %v1215
        %v1217 = vcombine.low %v1193, %v1209
        %v1218 = vcombine.high %v1193, %v1209
        %v1220 = vunpack.c.l.s4 1934713408
        %v1221 = vunpack.c.0.s8 %v1220
        %v1222 = vlaneseq
        %v1223 = vshrl.u32 %v1222, 7
        %v1224 = vsub.s32 %v1221, %v1223
        %v1225 = vrot.slane %v1217, %v1224
        %v1227 = vunpack.c.l.s4 1934713408
        %v1228 = vunpack.c.0.s8 %v1227
        %v1229 = vlaneseq
        %v1230 = vshrl.u32 %v1229, 7
        %v1231 = vsub.s32 %v1228, %v1230
        %v1232 = vrot.slane %v1218, %v1231
        %v1233 = vcombine.low %v1200, %v1216
        %v1234 = vcombine.high %v1200, %v1216
        %v1236 = vunpack.c.l.s4 1934713408
        %v1237 = vunpack.c.0.s8 %v1236
        %v1238 = vlaneseq
        %v1239 = vshrl.u32 %v1238, 7
        %v1240 = vsub.s32 %v1237, %v1239
        %v1241 = vrot.slane %v1233, %v1240
        %v1243 = vunpack.c.l.s4 1934713408
        %v1244 = vunpack.c.0.s8 %v1243
        %v1245 = vlaneseq
        %v1246 = vshrl.u32 %v1245, 7
        %v1247 = vsub.s32 %v1244, %v1246
        %v1248 = vrot.slane %v1234, %v1247
        %v1249 = vcombine.high %v1225, 0.0
        %v1250 = vcombine.high %v1232, 0.0
        %v1251 = vcombine.high %v1241, 0.0
        %v1252 = vcombine.high %v1248, 0.0
        %v1253 = vcombine.low %v1225, %v1232
        %v1255 = vunpack.c.l.s4 1983009808
        %v1256 = vunpack.c.0.s8 %v1255
        %v1257 = vlaneseq
        %v1258 = vshrl.u32 %v1257, 7
        %v1259 = vsub.s32 %v1256, %v1258
        %v1260 = vrot.slane %v1253, %v1259
        %v1261 = vcombine.low %v1249, %v1250
        %v1263 = vunpack.c.l.s4 1983009808
        %v1264 = vunpack.c.0.s8 %v1263
        %v1265 = vlaneseq
        %v1266 = vshrl.u32 %v1265, 7
        %v1267 = vsub.s32 %v1264, %v1266
        %v1268 = vrot.slane %v1261, %v1267
        %v1269 = vcombine.low %v1241, %v1248
        %v1271 = vunpack.c.l.s4 1983009808
        %v1272 = vunpack.c.0.s8 %v1271
        %v1273 = vlaneseq
        %v1274 = vshrl.u32 %v1273, 7
        %v1275 = vsub.s32 %v1272, %v1274
        %v1276 = vrot.slane %v1269, %v1275
        %v1277 = vcombine.low %v1251, %v1252
        %v1279 = vunpack.c.l.s4 1983009808
        %v1280 = vunpack.c.0.s8 %v1279
        %v1281 = vlaneseq
        %v1282 = vshrl.u32 %v1281, 7
        %v1283 = vsub.s32 %v1280, %v1282
        %v1284 = vrot.slane %v1277, %v1283
        %v1285 = vcombine.low %v1260, %v1268
        %v1286 = vcombine.high %v1260, %v1268
        %v1288 = vunpack.c.l.s4 1934713408
        %v1289 = vunpack.c.0.s8 %v1288
        %v1290 = vlaneseq
        %v1291 = vshrl.u32 %v1290, 7
        %v1292 = vsub.s32 %v1289, %v1291
        %v1293 = vrot.slane %v1285, %v1292
        %v1295 = vunpack.c.l.s4 1934713408
        %v1296 = vunpack.c.0.s8 %v1295
        %v1297 = vlaneseq
        %v1298 = vshrl.u32 %v1297, 7
        %v1299 = vsub.s32 %v1296, %v1298
        %v1300 = vrot.slane %v1286, %v1299
        %v1301 = vcombine.low %v1276, %v1284
        %v1302 = vcombine.high %v1276, %v1284
        %v1304 = vunpack.c.l.s4 1934713408
        %v1305 = vunpack.c.0.s8 %v1304
        %v1306 = vlaneseq
        %v1307 = vshrl.u32 %v1306, 7
        %v1308 = vsub.s32 %v1305, %v1307
        %v1309 = vrot.slane %v1301, %v1308
        %v1311 = vunpack.c.l.s4 1934713408
        %v1312 = vunpack.c.0.s8 %v1311
        %v1313 = vlaneseq
        %v1314 = vshrl.u32 %v1313, 7
        %v1315 = vsub.s32 %v1312, %v1314
        %v1316 = vrot.slane %v1302, %v1315
        %v1317 = vcombine.low %v1293, %v1309
        %v1318 = vcombine.high %v1293, %v1309
        %v1319 = vcombine.low %v1300, %v1316
        %v1320 = vcombine.high %v1300, %v1316
        %vm1321 = vcmask 64512
        %v1323 = vsel %vm1321, %v1025, 0
        %v1326 = vsel %vm1321, %v1171, 0
        %1328 = vmatprep.subr.mxu0 0.0
        %1329 = vmatpush1.xpose.msra.mxu0 0.0
        %1330 = vmatprep.subr.mxu0 0.0
        %1331 = vmatpush1.xpose.msra.mxu0 0.0
        %1332 = vmatprep.subr.mxu0 0.0
        %1333 = vmatpush1.xpose.msra.mxu0 0.0
        %1334 = vmatprep.subr.mxu0 0.0
        %1335 = vmatpush1.xpose.msra.mxu0 0.0
        %1336 = vmatprep.subr.mxu0 0.0
        %1337 = vmatpush1.xpose.msra.mxu0 0.0
        %1338 = vmatprep.subr.mxu0 0.0
        %1339 = vmatpush1.xpose.msra.mxu0 0.0
        %1340 = vmatprep.subr.mxu0 0.0
        %1341 = vmatpush1.xpose.msra.mxu0 0.0
        %1342 = vmatprep.subr.mxu0 0.0
        %1343 = vmatpush1.xpose.msra.mxu0 0.0
        %1344 = vmatprep.subr.mxu0 0.0
        %1345 = vmatpush1.xpose.msra.mxu0 0.0
        %1346 = vmatprep.subr.mxu0 0.0
        %1347 = vmatpush1.xpose.msra.mxu0 0.0
        %1348 = vmatprep.subr.mxu0 0.0
        %1349 = vmatpush1.xpose.msra.mxu0 0.0
        %1350 = vmatprep.subr.mxu0 0.0
        %1351 = vmatpush1.xpose.msra.mxu0 0.0
        %1352 = vmatprep.subr.mxu0 0.0
        %1353 = vmatpush1.xpose.msra.mxu0 0.0
        %1354 = vmatprep.subr.mxu0 0.0
        %1355 = vmatpush1.xpose.msra.mxu0 0.0
        %1356 = vmatprep.subr.mxu0 0.0
        %1357 = vmatpush1.xpose.msra.mxu0 0.0
        %1358 = vmatprep.subr.mxu0 0.0
        %1359 = vmatpush1.xpose.msra.mxu0 %v1326
        %1360 = vmatprep.subr.mxu0 0.0
        %1361 = vmatpush2.xpose.msra.mxu0 0.0
        %1362 = vmatprep.subr.mxu0 0.0
        %1363 = vmatpush2.xpose.msra.mxu0 0.0
        %1364 = vmatprep.subr.mxu0 0.0
        %1365 = vmatpush2.xpose.msra.mxu0 0.0
        %1366 = vmatprep.subr.mxu0 0.0
        %1367 = vmatpush2.xpose.msra.mxu0 0.0
        %1368 = vmatprep.subr.mxu0 0.0
        %1369 = vmatpush2.xpose.msra.mxu0 0.0
        %1370 = vmatprep.subr.mxu0 0.0
        %1371 = vmatpush2.xpose.msra.mxu0 0.0
        %1372 = vmatprep.subr.mxu0 0.0
        %1373 = vmatpush2.xpose.msra.mxu0 0.0
        %1374 = vmatprep.subr.mxu0 0.0
        %1375 = vmatpush2.xpose.msra.mxu0 0.0
        %1376 = vmatprep.subr.mxu0 0.0
        %1377 = vmatpush2.xpose.msra.mxu0 0.0
        %1378 = vmatprep.subr.mxu0 0.0
        %1379 = vmatpush2.xpose.msra.mxu0 0.0
        %1380 = vmatprep.subr.mxu0 0.0
        %1381 = vmatpush2.xpose.msra.mxu0 0.0
        %1382 = vmatprep.subr.mxu0 0.0
        %1383 = vmatpush2.xpose.msra.mxu0 0.0
        %1384 = vmatprep.subr.mxu0 0.0
        %1385 = vmatpush2.xpose.msra.mxu0 0.0
        %1386 = vmatprep.subr.mxu0 0.0
        %1387 = vmatpush2.xpose.msra.mxu0 0.0
        %1388 = vmatprep.subr.mxu0 0.0
        %1389 = vmatpush2.xpose.msra.mxu0 0.0
        %1390 = vmatprep.subr.mxu0 0.0
        %1391 = vmatpush2.xpose.msra.mxu0 0.0
        %1392 = vmatprep.mubr.f32.mxu0 0.0
        %1393 = vmatmul.mubr.f32.gmra.mxu0 %v1323
        %v1394 = vpop.f32.mrf.mxu0
        %v1395 = vadd.f32 %v605, %v1394
        %v1396 = vpop.f32.mrf.mxu0
        %1397 = vdwg.mxu0
        %v1399 = vsel %vm1321, %v1026, 0
        %v1402 = vsel %vm1321, %v1172, 0
        %1404 = vmatprep.subr.mxu0 0.0
        %1405 = vmatpush1.xpose.msra.mxu0 0.0
        %1406 = vmatprep.subr.mxu0 0.0
        %1407 = vmatpush1.xpose.msra.mxu0 0.0
        %1408 = vmatprep.subr.mxu0 0.0
        %1409 = vmatpush1.xpose.msra.mxu0 0.0
        %1410 = vmatprep.subr.mxu0 0.0
        %1411 = vmatpush1.xpose.msra.mxu0 0.0
        %1412 = vmatprep.subr.mxu0 0.0
        %1413 = vmatpush1.xpose.msra.mxu0 0.0
        %1414 = vmatprep.subr.mxu0 0.0
        %1415 = vmatpush1.xpose.msra.mxu0 0.0
        %1416 = vmatprep.subr.mxu0 0.0
        %1417 = vmatpush1.xpose.msra.mxu0 0.0
        %1418 = vmatprep.subr.mxu0 0.0
        %1419 = vmatpush1.xpose.msra.mxu0 0.0
        %1420 = vmatprep.subr.mxu0 0.0
        %1421 = vmatpush1.xpose.msra.mxu0 0.0
        %1422 = vmatprep.subr.mxu0 0.0
        %1423 = vmatpush1.xpose.msra.mxu0 0.0
        %1424 = vmatprep.subr.mxu0 0.0
        %1425 = vmatpush1.xpose.msra.mxu0 0.0
        %1426 = vmatprep.subr.mxu0 0.0
        %1427 = vmatpush1.xpose.msra.mxu0 0.0
        %1428 = vmatprep.subr.mxu0 0.0
        %1429 = vmatpush1.xpose.msra.mxu0 0.0
        %1430 = vmatprep.subr.mxu0 0.0
        %1431 = vmatpush1.xpose.msra.mxu0 0.0
        %1432 = vmatprep.subr.mxu0 0.0
        %1433 = vmatpush1.xpose.msra.mxu0 0.0
        %1434 = vmatprep.subr.mxu0 0.0
        %1435 = vmatpush1.xpose.msra.mxu0 %v1402
        %1436 = vmatprep.subr.mxu0 0.0
        %1437 = vmatpush2.xpose.msra.mxu0 0.0
        %1438 = vmatprep.subr.mxu0 0.0
        %1439 = vmatpush2.xpose.msra.mxu0 0.0
        %1440 = vmatprep.subr.mxu0 0.0
        %1441 = vmatpush2.xpose.msra.mxu0 0.0
        %1442 = vmatprep.subr.mxu0 0.0
        %1443 = vmatpush2.xpose.msra.mxu0 0.0
        %1444 = vmatprep.subr.mxu0 0.0
        %1445 = vmatpush2.xpose.msra.mxu0 0.0
        %1446 = vmatprep.subr.mxu0 0.0
        %1447 = vmatpush2.xpose.msra.mxu0 0.0
        %1448 = vmatprep.subr.mxu0 0.0
        %1449 = vmatpush2.xpose.msra.mxu0 0.0
        %1450 = vmatprep.subr.mxu0 0.0
        %1451 = vmatpush2.xpose.msra.mxu0 0.0
        %1452 = vmatprep.subr.mxu0 0.0
        %1453 = vmatpush2.xpose.msra.mxu0 0.0
        %1454 = vmatprep.subr.mxu0 0.0
        %1455 = vmatpush2.xpose.msra.mxu0 0.0
        %1456 = vmatprep.subr.mxu0 0.0
        %1457 = vmatpush2.xpose.msra.mxu0 0.0
        %1458 = vmatprep.subr.mxu0 0.0
        %1459 = vmatpush2.xpose.msra.mxu0 0.0
        %1460 = vmatprep.subr.mxu0 0.0
        %1461 = vmatpush2.xpose.msra.mxu0 0.0
        %1462 = vmatprep.subr.mxu0 0.0
        %1463 = vmatpush2.xpose.msra.mxu0 0.0
        %1464 = vmatprep.subr.mxu0 0.0
        %1465 = vmatpush2.xpose.msra.mxu0 0.0
        %1466 = vmatprep.subr.mxu0 0.0
        %1467 = vmatpush2.xpose.msra.mxu0 0.0
        %1468 = vmatprep.mubr.f32.mxu0 0.0
        %1469 = vmatmul.mubr.f32.gmra.mxu0 %v1399
        %v1470 = vpop.f32.mrf.mxu0
        %v1471 = vadd.f32 %v605, %v1470
        %v1472 = vpop.f32.mrf.mxu0
        %1473 = vdwg.mxu0
        %v1475 = vsel %vm1321, %v1027, 0
        %v1478 = vsel %vm1321, %v1173, 0
        %1480 = vmatprep.subr.mxu0 0.0
        %1481 = vmatpush1.xpose.msra.mxu0 0.0
        %1482 = vmatprep.subr.mxu0 0.0
        %1483 = vmatpush1.xpose.msra.mxu0 0.0
        %1484 = vmatprep.subr.mxu0 0.0
        %1485 = vmatpush1.xpose.msra.mxu0 0.0
        %1486 = vmatprep.subr.mxu0 0.0
        %1487 = vmatpush1.xpose.msra.mxu0 0.0
        %1488 = vmatprep.subr.mxu0 0.0
        %1489 = vmatpush1.xpose.msra.mxu0 0.0
        %1490 = vmatprep.subr.mxu0 0.0
        %1491 = vmatpush1.xpose.msra.mxu0 0.0
        %1492 = vmatprep.subr.mxu0 0.0
        %1493 = vmatpush1.xpose.msra.mxu0 0.0
        %1494 = vmatprep.subr.mxu0 0.0
        %1495 = vmatpush1.xpose.msra.mxu0 0.0
        %1496 = vmatprep.subr.mxu0 0.0
        %1497 = vmatpush1.xpose.msra.mxu0 0.0
        %1498 = vmatprep.subr.mxu0 0.0
        %1499 = vmatpush1.xpose.msra.mxu0 0.0
        %1500 = vmatprep.subr.mxu0 0.0
        %1501 = vmatpush1.xpose.msra.mxu0 0.0
        %1502 = vmatprep.subr.mxu0 0.0
        %1503 = vmatpush1.xpose.msra.mxu0 0.0
        %1504 = vmatprep.subr.mxu0 0.0
        %1505 = vmatpush1.xpose.msra.mxu0 0.0
        %1506 = vmatprep.subr.mxu0 0.0
        %1507 = vmatpush1.xpose.msra.mxu0 0.0
        %1508 = vmatprep.subr.mxu0 0.0
        %1509 = vmatpush1.xpose.msra.mxu0 0.0
        %1510 = vmatprep.subr.mxu0 0.0
        %1511 = vmatpush1.xpose.msra.mxu0 %v1478
        %1512 = vmatprep.subr.mxu0 0.0
        %1513 = vmatpush2.xpose.msra.mxu0 0.0
        %1514 = vmatprep.subr.mxu0 0.0
        %1515 = vmatpush2.xpose.msra.mxu0 0.0
        %1516 = vmatprep.subr.mxu0 0.0
        %1517 = vmatpush2.xpose.msra.mxu0 0.0
        %1518 = vmatprep.subr.mxu0 0.0
        %1519 = vmatpush2.xpose.msra.mxu0 0.0
        %1520 = vmatprep.subr.mxu0 0.0
        %1521 = vmatpush2.xpose.msra.mxu0 0.0
        %1522 = vmatprep.subr.mxu0 0.0
        %1523 = vmatpush2.xpose.msra.mxu0 0.0
        %1524 = vmatprep.subr.mxu0 0.0
        %1525 = vmatpush2.xpose.msra.mxu0 0.0
        %1526 = vmatprep.subr.mxu0 0.0
        %1527 = vmatpush2.xpose.msra.mxu0 0.0
        %1528 = vmatprep.subr.mxu0 0.0
        %1529 = vmatpush2.xpose.msra.mxu0 0.0
        %1530 = vmatprep.subr.mxu0 0.0
        %1531 = vmatpush2.xpose.msra.mxu0 0.0
        %1532 = vmatprep.subr.mxu0 0.0
        %1533 = vmatpush2.xpose.msra.mxu0 0.0
        %1534 = vmatprep.subr.mxu0 0.0
        %1535 = vmatpush2.xpose.msra.mxu0 0.0
        %1536 = vmatprep.subr.mxu0 0.0
        %1537 = vmatpush2.xpose.msra.mxu0 0.0
        %1538 = vmatprep.subr.mxu0 0.0
        %1539 = vmatpush2.xpose.msra.mxu0 0.0
        %1540 = vmatprep.subr.mxu0 0.0
        %1541 = vmatpush2.xpose.msra.mxu0 0.0
        %1542 = vmatprep.subr.mxu0 0.0
        %1543 = vmatpush2.xpose.msra.mxu0 0.0
        %1544 = vmatprep.mubr.f32.mxu0 0.0
        %1545 = vmatmul.mubr.f32.gmra.mxu0 %v1475
        %v1546 = vpop.f32.mrf.mxu0
        %v1547 = vadd.f32 %v605, %v1546
        %v1548 = vpop.f32.mrf.mxu0
        %1549 = vdwg.mxu0
        %v1551 = vsel %vm1321, %v1028, 0
        %v1554 = vsel %vm1321, %v1174, 0
        %1556 = vmatprep.subr.mxu0 0.0
        %1557 = vmatpush1.xpose.msra.mxu0 0.0
        %1558 = vmatprep.subr.mxu0 0.0
        %1559 = vmatpush1.xpose.msra.mxu0 0.0
        %1560 = vmatprep.subr.mxu0 0.0
        %1561 = vmatpush1.xpose.msra.mxu0 0.0
        %1562 = vmatprep.subr.mxu0 0.0
        %1563 = vmatpush1.xpose.msra.mxu0 0.0
        %1564 = vmatprep.subr.mxu0 0.0
        %1565 = vmatpush1.xpose.msra.mxu0 0.0
        %1566 = vmatprep.subr.mxu0 0.0
        %1567 = vmatpush1.xpose.msra.mxu0 0.0
        %1568 = vmatprep.subr.mxu0 0.0
        %1569 = vmatpush1.xpose.msra.mxu0 0.0
        %1570 = vmatprep.subr.mxu0 0.0
        %1571 = vmatpush1.xpose.msra.mxu0 0.0
        %1572 = vmatprep.subr.mxu0 0.0
        %1573 = vmatpush1.xpose.msra.mxu0 0.0
        %1574 = vmatprep.subr.mxu0 0.0
        %1575 = vmatpush1.xpose.msra.mxu0 0.0
        %1576 = vmatprep.subr.mxu0 0.0
        %1577 = vmatpush1.xpose.msra.mxu0 0.0
        %1578 = vmatprep.subr.mxu0 0.0
        %1579 = vmatpush1.xpose.msra.mxu0 0.0
        %1580 = vmatprep.subr.mxu0 0.0
        %1581 = vmatpush1.xpose.msra.mxu0 0.0
        %1582 = vmatprep.subr.mxu0 0.0
        %1583 = vmatpush1.xpose.msra.mxu0 0.0
        %1584 = vmatprep.subr.mxu0 0.0
        %1585 = vmatpush1.xpose.msra.mxu0 0.0
        %1586 = vmatprep.subr.mxu0 0.0
        %1587 = vmatpush1.xpose.msra.mxu0 %v1554
        %1588 = vmatprep.subr.mxu0 0.0
        %1589 = vmatpush2.xpose.msra.mxu0 0.0
        %1590 = vmatprep.subr.mxu0 0.0
        %1591 = vmatpush2.xpose.msra.mxu0 0.0
        %1592 = vmatprep.subr.mxu0 0.0
        %1593 = vmatpush2.xpose.msra.mxu0 0.0
        %1594 = vmatprep.subr.mxu0 0.0
        %1595 = vmatpush2.xpose.msra.mxu0 0.0
        %1596 = vmatprep.subr.mxu0 0.0
        %1597 = vmatpush2.xpose.msra.mxu0 0.0
        %1598 = vmatprep.subr.mxu0 0.0
        %1599 = vmatpush2.xpose.msra.mxu0 0.0
        %1600 = vmatprep.subr.mxu0 0.0
        %1601 = vmatpush2.xpose.msra.mxu0 0.0
        %1602 = vmatprep.subr.mxu0 0.0
        %1603 = vmatpush2.xpose.msra.mxu0 0.0
        %1604 = vmatprep.subr.mxu0 0.0
        %1605 = vmatpush2.xpose.msra.mxu0 0.0
        %1606 = vmatprep.subr.mxu0 0.0
        %1607 = vmatpush2.xpose.msra.mxu0 0.0
        %1608 = vmatprep.subr.mxu0 0.0
        %1609 = vmatpush2.xpose.msra.mxu0 0.0
        %1610 = vmatprep.subr.mxu0 0.0
        %1611 = vmatpush2.xpose.msra.mxu0 0.0
        %1612 = vmatprep.subr.mxu0 0.0
        %1613 = vmatpush2.xpose.msra.mxu0 0.0
        %1614 = vmatprep.subr.mxu0 0.0
        %1615 = vmatpush2.xpose.msra.mxu0 0.0
        %1616 = vmatprep.subr.mxu0 0.0
        %1617 = vmatpush2.xpose.msra.mxu0 0.0
        %1618 = vmatprep.subr.mxu0 0.0
        %1619 = vmatpush2.xpose.msra.mxu0 0.0
        %1620 = vmatprep.mubr.f32.mxu0 0.0
        %1621 = vmatmul.mubr.f32.gmra.mxu0 %v1551
        %v1622 = vpop.f32.mrf.mxu0
        %v1623 = vadd.f32 %v605, %v1622
        %v1624 = vpop.f32.mrf.mxu0
        %1625 = vdwg.mxu0
        %v1626 = vsel %vm1321, %v1395, -inf
        %1627 = vmax.xlane.f32.xlu0 %v1626
        %v1628 = vpop.xlane.xlu0 %1627
        %v1629 = vsel %vm1321, %v1471, -inf
        %1630 = vmax.xlane.f32.xlu0 %v1629
        %v1631 = vpop.xlane.xlu0 %1630
        %v1632 = vsel %vm1321, %v1547, -inf
        %1633 = vmax.xlane.f32.xlu0 %v1632
        %v1634 = vpop.xlane.xlu0 %1633
        %v1635 = vsel %vm1321, %v1623, -inf
        %1636 = vmax.xlane.f32.xlu0 %v1635
        %v1637 = vpop.xlane.xlu0 %1636
        %v1638 = vsub.f32 %v1395, %v1628
        %v1639 = vsub.f32 %v1471, %v1631
        %v1640 = vsub.f32 %v1547, %v1634
        %v1641 = vsub.f32 %v1623, %v1637
        %v1642 = vmul.f32 %v1638, 1.442695
        %v1643 = vpow.pop %v1642
        %v1644 = vmul.f32 %v1639, 1.442695
        %v1645 = vpow.pop %v1644
        %v1646 = vmul.f32 %v1640, 1.442695
        %v1647 = vpow.pop %v1646
        %v1648 = vmul.f32 %v1641, 1.442695
        %v1649 = vpow.pop %v1648
        %v1650 = vsel %vm1321, %v1643, 0.0
        %1651 = vadd.xlane.f32.xlu0 %v1650
        %v1652 = vpop.xlane.xlu0 %1651
        %v1653 = vsel %vm1321, %v1645, 0.0
        %1654 = vadd.xlane.f32.xlu0 %v1653
        %v1655 = vpop.xlane.xlu0 %1654
        %v1656 = vsel %vm1321, %v1647, 0.0
        %1657 = vadd.xlane.f32.xlu0 %v1656
        %v1658 = vpop.xlane.xlu0 %1657
        %v1659 = vsel %vm1321, %v1649, 0.0
        %1660 = vadd.xlane.f32.xlu0 %v1659
        %v1661 = vpop.xlane.xlu0 %1660
        %v1662 = vrcp.pop %v1652
        %v1663 = vrcp.pop %v1655
        %v1664 = vrcp.pop %v1658
        %v1665 = vrcp.pop %v1661
        %v1666 = vmul.f32 %v1643, %v1662
        %v1667 = vmul.f32 %v1645, %v1663
        %v1668 = vmul.f32 %v1647, %v1664
        %v1669 = vmul.f32 %v1649, %v1665
        %v1671 = vsel %vm1321, %v1666, 0
        %1673 = vmatprep.subr.mxu0 0.0
        %1674 = vmatpush1.msra.mxu0 0.0
        %1675 = vmatprep.subr.mxu0 0.0
        %1676 = vmatpush1.msra.mxu0 0.0
        %1677 = vmatprep.subr.mxu0 0.0
        %1678 = vmatpush1.msra.mxu0 0.0
        %1679 = vmatprep.subr.mxu0 0.0
        %1680 = vmatpush1.msra.mxu0 0.0
        %1681 = vmatprep.subr.mxu0 0.0
        %1682 = vmatpush1.msra.mxu0 0.0
        %1683 = vmatprep.subr.mxu0 0.0
        %1684 = vmatpush1.msra.mxu0 0.0
        %1685 = vmatprep.subr.mxu0 0.0
        %1686 = vmatpush1.msra.mxu0 0.0
        %1687 = vmatprep.subr.mxu0 0.0
        %1688 = vmatpush1.msra.mxu0 0.0
        %1689 = vmatprep.subr.mxu0 0.0
        %1690 = vmatpush1.msra.mxu0 0.0
        %1691 = vmatprep.subr.mxu0 0.0
        %1692 = vmatpush1.msra.mxu0 0.0
        %1693 = vmatprep.subr.mxu0 0.0
        %1694 = vmatpush1.msra.mxu0 0.0
        %1695 = vmatprep.subr.mxu0 0.0
        %1696 = vmatpush1.msra.mxu0 0.0
        %1697 = vmatprep.subr.mxu0 0.0
        %1698 = vmatpush1.msra.mxu0 0.0
        %1699 = vmatprep.subr.mxu0 0.0
        %1700 = vmatpush1.msra.mxu0 0.0
        %1701 = vmatprep.subr.mxu0 0.0
        %1702 = vmatpush1.msra.mxu0 0.0
        %1703 = vmatprep.subr.mxu0 0.0
        %1704 = vmatpush1.msra.mxu0 %v1317
        %1705 = vmatprep.subr.mxu0 0.0
        %1706 = vmatpush2.msra.mxu0 0.0
        %1707 = vmatprep.subr.mxu0 0.0
        %1708 = vmatpush2.msra.mxu0 0.0
        %1709 = vmatprep.subr.mxu0 0.0
        %1710 = vmatpush2.msra.mxu0 0.0
        %1711 = vmatprep.subr.mxu0 0.0
        %1712 = vmatpush2.msra.mxu0 0.0
        %1713 = vmatprep.subr.mxu0 0.0
        %1714 = vmatpush2.msra.mxu0 0.0
        %1715 = vmatprep.subr.mxu0 0.0
        %1716 = vmatpush2.msra.mxu0 0.0
        %1717 = vmatprep.subr.mxu0 0.0
        %1718 = vmatpush2.msra.mxu0 0.0
        %1719 = vmatprep.subr.mxu0 0.0
        %1720 = vmatpush2.msra.mxu0 0.0
        %1721 = vmatprep.subr.mxu0 0.0
        %1722 = vmatpush2.msra.mxu0 0.0
        %1723 = vmatprep.subr.mxu0 0.0
        %1724 = vmatpush2.msra.mxu0 0.0
        %1725 = vmatprep.subr.mxu0 0.0
        %1726 = vmatpush2.msra.mxu0 0.0
        %1727 = vmatprep.subr.mxu0 0.0
        %1728 = vmatpush2.msra.mxu0 0.0
        %1729 = vmatprep.subr.mxu0 0.0
        %1730 = vmatpush2.msra.mxu0 0.0
        %1731 = vmatprep.subr.mxu0 0.0
        %1732 = vmatpush2.msra.mxu0 0.0
        %1733 = vmatprep.subr.mxu0 0.0
        %1734 = vmatpush2.msra.mxu0 0.0
        %1735 = vmatprep.subr.mxu0 0.0
        %1736 = vmatpush2.msra.mxu0 0.0
        %1737 = vmatprep.mubr.f32.mxu0 0.0
        %1738 = vmatmul.mubr.f32.gmra.mxu0 %v1671
        %v1739 = vpop.f32.mrf.mxu0
        %v1740 = vadd.f32 0.0, %v1739
        %v1741 = vpop.f32.mrf.mxu0
        %1742 = vdwg.mxu0
        %v1744 = vsel %vm1321, %v1667, 0
        %1746 = vmatprep.subr.mxu0 0.0
        %1747 = vmatpush1.msra.mxu0 0.0
        %1748 = vmatprep.subr.mxu0 0.0
        %1749 = vmatpush1.msra.mxu0 0.0
        %1750 = vmatprep.subr.mxu0 0.0
        %1751 = vmatpush1.msra.mxu0 0.0
        %1752 = vmatprep.subr.mxu0 0.0
        %1753 = vmatpush1.msra.mxu0 0.0
        %1754 = vmatprep.subr.mxu0 0.0
        %1755 = vmatpush1.msra.mxu0 0.0
        %1756 = vmatprep.subr.mxu0 0.0
        %1757 = vmatpush1.msra.mxu0 0.0
        %1758 = vmatprep.subr.mxu0 0.0
        %1759 = vmatpush1.msra.mxu0 0.0
        %1760 = vmatprep.subr.mxu0 0.0
        %1761 = vmatpush1.msra.mxu0 0.0
        %1762 = vmatprep.subr.mxu0 0.0
        %1763 = vmatpush1.msra.mxu0 0.0
        %1764 = vmatprep.subr.mxu0 0.0
        %1765 = vmatpush1.msra.mxu0 0.0
        %1766 = vmatprep.subr.mxu0 0.0
        %1767 = vmatpush1.msra.mxu0 0.0
        %1768 = vmatprep.subr.mxu0 0.0
        %1769 = vmatpush1.msra.mxu0 0.0
        %1770 = vmatprep.subr.mxu0 0.0
        %1771 = vmatpush1.msra.mxu0 0.0
        %1772 = vmatprep.subr.mxu0 0.0
        %1773 = vmatpush1.msra.mxu0 0.0
        %1774 = vmatprep.subr.mxu0 0.0
        %1775 = vmatpush1.msra.mxu0 0.0
        %1776 = vmatprep.subr.mxu0 0.0
        %1777 = vmatpush1.msra.mxu0 %v1318
        %1778 = vmatprep.subr.mxu0 0.0
        %1779 = vmatpush2.msra.mxu0 0.0
        %1780 = vmatprep.subr.mxu0 0.0
        %1781 = vmatpush2.msra.mxu0 0.0
        %1782 = vmatprep.subr.mxu0 0.0
        %1783 = vmatpush2.msra.mxu0 0.0
        %1784 = vmatprep.subr.mxu0 0.0
        %1785 = vmatpush2.msra.mxu0 0.0
        %1786 = vmatprep.subr.mxu0 0.0
        %1787 = vmatpush2.msra.mxu0 0.0
        %1788 = vmatprep.subr.mxu0 0.0
        %1789 = vmatpush2.msra.mxu0 0.0
        %1790 = vmatprep.subr.mxu0 0.0
        %1791 = vmatpush2.msra.mxu0 0.0
        %1792 = vmatprep.subr.mxu0 0.0
        %1793 = vmatpush2.msra.mxu0 0.0
        %1794 = vmatprep.subr.mxu0 0.0
        %1795 = vmatpush2.msra.mxu0 0.0
        %1796 = vmatprep.subr.mxu0 0.0
        %1797 = vmatpush2.msra.mxu0 0.0
        %1798 = vmatprep.subr.mxu0 0.0
        %1799 = vmatpush2.msra.mxu0 0.0
        %1800 = vmatprep.subr.mxu0 0.0
        %1801 = vmatpush2.msra.mxu0 0.0
        %1802 = vmatprep.subr.mxu0 0.0
        %1803 = vmatpush2.msra.mxu0 0.0
        %1804 = vmatprep.subr.mxu0 0.0
        %1805 = vmatpush2.msra.mxu0 0.0
        %1806 = vmatprep.subr.mxu0 0.0
        %1807 = vmatpush2.msra.mxu0 0.0
        %1808 = vmatprep.subr.mxu0 0.0
        %1809 = vmatpush2.msra.mxu0 0.0
        %1810 = vmatprep.mubr.f32.mxu0 0.0
        %1811 = vmatmul.mubr.f32.gmra.mxu0 %v1744
        %v1812 = vpop.f32.mrf.mxu0
        %v1813 = vadd.f32 0.0, %v1812
        %v1814 = vpop.f32.mrf.mxu0
        %1815 = vdwg.mxu0
        %v1817 = vsel %vm1321, %v1668, 0
        %1819 = vmatprep.subr.mxu0 0.0
        %1820 = vmatpush1.msra.mxu0 0.0
        %1821 = vmatprep.subr.mxu0 0.0
        %1822 = vmatpush1.msra.mxu0 0.0
        %1823 = vmatprep.subr.mxu0 0.0
        %1824 = vmatpush1.msra.mxu0 0.0
        %1825 = vmatprep.subr.mxu0 0.0
        %1826 = vmatpush1.msra.mxu0 0.0
        %1827 = vmatprep.subr.mxu0 0.0
        %1828 = vmatpush1.msra.mxu0 0.0
        %1829 = vmatprep.subr.mxu0 0.0
        %1830 = vmatpush1.msra.mxu0 0.0
        %1831 = vmatprep.subr.mxu0 0.0
        %1832 = vmatpush1.msra.mxu0 0.0
        %1833 = vmatprep.subr.mxu0 0.0
        %1834 = vmatpush1.msra.mxu0 0.0
        %1835 = vmatprep.subr.mxu0 0.0
        %1836 = vmatpush1.msra.mxu0 0.0
        %1837 = vmatprep.subr.mxu0 0.0
        %1838 = vmatpush1.msra.mxu0 0.0
        %1839 = vmatprep.subr.mxu0 0.0
        %1840 = vmatpush1.msra.mxu0 0.0
        %1841 = vmatprep.subr.mxu0 0.0
        %1842 = vmatpush1.msra.mxu0 0.0
        %1843 = vmatprep.subr.mxu0 0.0
        %1844 = vmatpush1.msra.mxu0 0.0
        %1845 = vmatprep.subr.mxu0 0.0
        %1846 = vmatpush1.msra.mxu0 0.0
        %1847 = vmatprep.subr.mxu0 0.0
        %1848 = vmatpush1.msra.mxu0 0.0
        %1849 = vmatprep.subr.mxu0 0.0
        %1850 = vmatpush1.msra.mxu0 %v1319
        %1851 = vmatprep.subr.mxu0 0.0
        %1852 = vmatpush2.msra.mxu0 0.0
        %1853 = vmatprep.subr.mxu0 0.0
        %1854 = vmatpush2.msra.mxu0 0.0
        %1855 = vmatprep.subr.mxu0 0.0
        %1856 = vmatpush2.msra.mxu0 0.0
        %1857 = vmatprep.subr.mxu0 0.0
        %1858 = vmatpush2.msra.mxu0 0.0
        %1859 = vmatprep.subr.mxu0 0.0
        %1860 = vmatpush2.msra.mxu0 0.0
        %1861 = vmatprep.subr.mxu0 0.0
        %1862 = vmatpush2.msra.mxu0 0.0
        %1863 = vmatprep.subr.mxu0 0.0
        %1864 = vmatpush2.msra.mxu0 0.0
        %1865 = vmatprep.subr.mxu0 0.0
        %1866 = vmatpush2.msra.mxu0 0.0
        %1867 = vmatprep.subr.mxu0 0.0
        %1868 = vmatpush2.msra.mxu0 0.0
        %1869 = vmatprep.subr.mxu0 0.0
        %1870 = vmatpush2.msra.mxu0 0.0
        %1871 = vmatprep.subr.mxu0 0.0
        %1872 = vmatpush2.msra.mxu0 0.0
        %1873 = vmatprep.subr.mxu0 0.0
        %1874 = vmatpush2.msra.mxu0 0.0
        %1875 = vmatprep.subr.mxu0 0.0
        %1876 = vmatpush2.msra.mxu0 0.0
        %1877 = vmatprep.subr.mxu0 0.0
        %1878 = vmatpush2.msra.mxu0 0.0
        %1879 = vmatprep.subr.mxu0 0.0
        %1880 = vmatpush2.msra.mxu0 0.0
        %1881 = vmatprep.subr.mxu0 0.0
        %1882 = vmatpush2.msra.mxu0 0.0
        %1883 = vmatprep.mubr.f32.mxu0 0.0
        %1884 = vmatmul.mubr.f32.gmra.mxu0 %v1817
        %v1885 = vpop.f32.mrf.mxu0
        %v1886 = vadd.f32 0.0, %v1885
        %v1887 = vpop.f32.mrf.mxu0
        %1888 = vdwg.mxu0
        %v1890 = vsel %vm1321, %v1669, 0
        %1892 = vmatprep.subr.mxu0 0.0
        %1893 = vmatpush1.msra.mxu0 0.0
        %1894 = vmatprep.subr.mxu0 0.0
        %1895 = vmatpush1.msra.mxu0 0.0
        %1896 = vmatprep.subr.mxu0 0.0
        %1897 = vmatpush1.msra.mxu0 0.0
        %1898 = vmatprep.subr.mxu0 0.0
        %1899 = vmatpush1.msra.mxu0 0.0
        %1900 = vmatprep.subr.mxu0 0.0
        %1901 = vmatpush1.msra.mxu0 0.0
        %1902 = vmatprep.subr.mxu0 0.0
        %1903 = vmatpush1.msra.mxu0 0.0
        %1904 = vmatprep.subr.mxu0 0.0
        %1905 = vmatpush1.msra.mxu0 0.0
        %1906 = vmatprep.subr.mxu0 0.0
        %1907 = vmatpush1.msra.mxu0 0.0
        %1908 = vmatprep.subr.mxu0 0.0
        %1909 = vmatpush1.msra.mxu0 0.0
        %1910 = vmatprep.subr.mxu0 0.0
        %1911 = vmatpush1.msra.mxu0 0.0
        %1912 = vmatprep.subr.mxu0 0.0
        %1913 = vmatpush1.msra.mxu0 0.0
        %1914 = vmatprep.subr.mxu0 0.0
        %1915 = vmatpush1.msra.mxu0 0.0
        %1916 = vmatprep.subr.mxu0 0.0
        %1917 = vmatpush1.msra.mxu0 0.0
        %1918 = vmatprep.subr.mxu0 0.0
        %1919 = vmatpush1.msra.mxu0 0.0
        %1920 = vmatprep.subr.mxu0 0.0
        %1921 = vmatpush1.msra.mxu0 0.0
        %1922 = vmatprep.subr.mxu0 0.0
        %1923 = vmatpush1.msra.mxu0 %v1320
        %1924 = vmatprep.subr.mxu0 0.0
        %1925 = vmatpush2.msra.mxu0 0.0
        %1926 = vmatprep.subr.mxu0 0.0
        %1927 = vmatpush2.msra.mxu0 0.0
        %1928 = vmatprep.subr.mxu0 0.0
        %1929 = vmatpush2.msra.mxu0 0.0
        %1930 = vmatprep.subr.mxu0 0.0
        %1931 = vmatpush2.msra.mxu0 0.0
        %1932 = vmatprep.subr.mxu0 0.0
        %1933 = vmatpush2.msra.mxu0 0.0
        %1934 = vmatprep.subr.mxu0 0.0
        %1935 = vmatpush2.msra.mxu0 0.0
        %1936 = vmatprep.subr.mxu0 0.0
        %1937 = vmatpush2.msra.mxu0 0.0
        %1938 = vmatprep.subr.mxu0 0.0
        %1939 = vmatpush2.msra.mxu0 0.0
        %1940 = vmatprep.subr.mxu0 0.0
        %1941 = vmatpush2.msra.mxu0 0.0
        %1942 = vmatprep.subr.mxu0 0.0
        %1943 = vmatpush2.msra.mxu0 0.0
        %1944 = vmatprep.subr.mxu0 0.0
        %1945 = vmatpush2.msra.mxu0 0.0
        %1946 = vmatprep.subr.mxu0 0.0
        %1947 = vmatpush2.msra.mxu0 0.0
        %1948 = vmatprep.subr.mxu0 0.0
        %1949 = vmatpush2.msra.mxu0 0.0
        %1950 = vmatprep.subr.mxu0 0.0
        %1951 = vmatpush2.msra.mxu0 0.0
        %1952 = vmatprep.subr.mxu0 0.0
        %1953 = vmatpush2.msra.mxu0 0.0
        %1954 = vmatprep.subr.mxu0 0.0
        %1955 = vmatpush2.msra.mxu0 0.0
        %1956 = vmatprep.mubr.f32.mxu0 0.0
        %1957 = vmatmul.mubr.f32.gmra.mxu0 %v1890
        %v1958 = vpop.f32.mrf.mxu0
        %v1959 = vadd.f32 0.0, %v1958
        %v1960 = vpop.f32.mrf.mxu0
        %1961 = vdwg.mxu0
        %v1962 = vcombine.low %v1740, %v1886
        %v1963 = vcombine.high %v1740, %v1886
        %v1965 = vunpack.c.l.s4 1983009808
        %v1966 = vunpack.c.0.s8 %v1965
        %v1967 = vlaneseq
        %v1968 = vshrl.u32 %v1967, 7
        %v1969 = vsub.s32 %v1966, %v1968
        %v1970 = vrot.slane %v1962, %v1969
        %v1972 = vunpack.c.l.s4 1983009808
        %v1973 = vunpack.c.0.s8 %v1972
        %v1974 = vlaneseq
        %v1975 = vshrl.u32 %v1974, 7
        %v1976 = vsub.s32 %v1973, %v1975
        %v1977 = vrot.slane %v1963, %v1976
        %v1978 = vcombine.low %v1813, %v1959
        %v1979 = vcombine.high %v1813, %v1959
        %v1981 = vunpack.c.l.s4 1983009808
        %v1982 = vunpack.c.0.s8 %v1981
        %v1983 = vlaneseq
        %v1984 = vshrl.u32 %v1983, 7
        %v1985 = vsub.s32 %v1982, %v1984
        %v1986 = vrot.slane %v1978, %v1985
        %v1988 = vunpack.c.l.s4 1983009808
        %v1989 = vunpack.c.0.s8 %v1988
        %v1990 = vlaneseq
        %v1991 = vshrl.u32 %v1990, 7
        %v1992 = vsub.s32 %v1989, %v1991
        %v1993 = vrot.slane %v1979, %v1992
        %v1994 = vcombine.low %v1970, %v1986
        %v1995 = vcombine.high %v1970, %v1986
        %v1997 = vunpack.c.l.s4 1934713408
        %v1998 = vunpack.c.0.s8 %v1997
        %v1999 = vlaneseq
        %v2000 = vshrl.u32 %v1999, 7
        %v2001 = vsub.s32 %v1998, %v2000
        %v2002 = vrot.slane %v1994, %v2001
        %v2004 = vunpack.c.l.s4 1934713408
        %v2005 = vunpack.c.0.s8 %v2004
        %v2006 = vlaneseq
        %v2007 = vshrl.u32 %v2006, 7
        %v2008 = vsub.s32 %v2005, %v2007
        %v2009 = vrot.slane %v1995, %v2008
        %v2010 = vcombine.low %v1977, %v1993
        %v2011 = vcombine.high %v1977, %v1993
        %v2013 = vunpack.c.l.s4 1934713408
        %v2014 = vunpack.c.0.s8 %v2013
        %v2015 = vlaneseq
        %v2016 = vshrl.u32 %v2015, 7
        %v2017 = vsub.s32 %v2014, %v2016
        %v2018 = vrot.slane %v2010, %v2017
        %v2020 = vunpack.c.l.s4 1934713408
        %v2021 = vunpack.c.0.s8 %v2020
        %v2022 = vlaneseq
        %v2023 = vshrl.u32 %v2022, 7
        %v2024 = vsub.s32 %v2021, %v2023
        %v2025 = vrot.slane %v2011, %v2024
        %v2026 = vcombine.high %v2002, 0.0
        %v2027 = vcombine.high %v2009, 0.0
        %v2028 = vcombine.high %v2018, 0.0
        %v2029 = vcombine.high %v2025, 0.0
        %v2030 = vcombine.low %v2002, %v2009
        %v2032 = vunpack.c.l.s4 1983009808
        %v2033 = vunpack.c.0.s8 %v2032
        %v2034 = vlaneseq
        %v2035 = vshrl.u32 %v2034, 7
        %v2036 = vsub.s32 %v2033, %v2035
        %v2037 = vrot.slane %v2030, %v2036
        %v2038 = vcombine.low %v2026, %v2027
        %v2040 = vunpack.c.l.s4 1983009808
        %v2041 = vunpack.c.0.s8 %v2040
        %v2042 = vlaneseq
        %v2043 = vshrl.u32 %v2042, 7
        %v2044 = vsub.s32 %v2041, %v2043
        %v2045 = vrot.slane %v2038, %v2044
        %v2046 = vcombine.low %v2018, %v2025
        %v2048 = vunpack.c.l.s4 1983009808
        %v2049 = vunpack.c.0.s8 %v2048
        %v2050 = vlaneseq
        %v2051 = vshrl.u32 %v2050, 7
        %v2052 = vsub.s32 %v2049, %v2051
        %v2053 = vrot.slane %v2046, %v2052
        %v2054 = vcombine.low %v2028, %v2029
        %v2056 = vunpack.c.l.s4 1983009808
        %v2057 = vunpack.c.0.s8 %v2056
        %v2058 = vlaneseq
        %v2059 = vshrl.u32 %v2058, 7
        %v2060 = vsub.s32 %v2057, %v2059
        %v2061 = vrot.slane %v2054, %v2060
        %v2062 = vcombine.low %v2037, %v2045
        %v2063 = vcombine.high %v2037, %v2045
        %v2065 = vunpack.c.l.s4 1934713408
        %v2066 = vunpack.c.0.s8 %v2065
        %v2067 = vlaneseq
        %v2068 = vshrl.u32 %v2067, 7
        %v2069 = vsub.s32 %v2066, %v2068
        %v2070 = vrot.slane %v2062, %v2069
        %v2072 = vunpack.c.l.s4 1934713408
        %v2073 = vunpack.c.0.s8 %v2072
        %v2074 = vlaneseq
        %v2075 = vshrl.u32 %v2074, 7
        %v2076 = vsub.s32 %v2073, %v2075
        %v2077 = vrot.slane %v2063, %v2076
        %v2078 = vcombine.low %v2053, %v2061
        %v2079 = vcombine.high %v2053, %v2061
        %v2081 = vunpack.c.l.s4 1934713408
        %v2082 = vunpack.c.0.s8 %v2081
        %v2083 = vlaneseq
        %v2084 = vshrl.u32 %v2083, 7
        %v2085 = vsub.s32 %v2082, %v2084
        %v2086 = vrot.slane %v2078, %v2085
        %v2088 = vunpack.c.l.s4 1934713408
        %v2089 = vunpack.c.0.s8 %v2088
        %v2090 = vlaneseq
        %v2091 = vshrl.u32 %v2090, 7
        %v2092 = vsub.s32 %v2089, %v2091
        %v2093 = vrot.slane %v2079, %v2092
        %v2094 = vcombine.low %v2070, %v2086
        %v2095 = vcombine.high %v2070, %v2086
        %v2096 = vcombine.low %v2077, %v2093
        %v2097 = vcombine.high %v2077, %v2093
        %2099 = vrot.lane.b32.xlu0 %v2095, 8
        %v2100 = vpop.permute.xlu0 %2099
        %2103 = vrot.lane.b32.xlu0 %v2096, 16
        %v2104 = vpop.permute.xlu0 %2103
        %2107 = vrot.lane.b32.xlu0 %v2097, 24
        %v2108 = vpop.permute.xlu0 %2107
        %v2110 = vsel %vm1321, %v2094, %v2100
        %vm2111 = vcmask 130048
        %v2112 = vsel %vm2111, %v2110, %v2104
        %vm2113 = vcmask 195584
        %v2114 = vsel %vm2113, %v2112, %v2108
        %v2115 = vld [vmem:[%s12] sm:$0xff]
        %v2116 = vld [vmem:[%s12 + $0x8] sm:$0xff]
        %v2117 = vld [vmem:[%s12 + $0x10] sm:$0xff]
        %v2118 = vld [vmem:[%s12 + $0x18] sm:$0xff]
        %v2119 = vld [vmem:[%s13] sm:$0x1]
        %v2121 = vlaneseq
        %v2122 = vshrl.u32 %v2121, 7
        %v2123 = vsub.s32 0, %v2122
        %v2124 = vrot.slane %v2119, %v2123
        %v2127 = vsel %vm608, %v2114, 0
        %2129 = vmatprep.subr.mxu0 0.0
        %2130 = vmatpush1.msra.mxu0 0.0
        %2131 = vmatprep.subr.mxu0 0.0
        %2132 = vmatpush1.msra.mxu0 0.0
        %2133 = vmatprep.subr.mxu0 0.0
        %2134 = vmatpush1.msra.mxu0 0.0
        %2135 = vmatprep.subr.mxu0 0.0
        %2136 = vmatpush1.msra.mxu0 0.0
        %2137 = vmatprep.subr.mxu0 0.0
        %2138 = vmatpush1.msra.mxu0 0.0
        %2139 = vmatprep.subr.mxu0 0.0
        %2140 = vmatpush1.msra.mxu0 0.0
        %2141 = vmatprep.subr.mxu0 0.0
        %2142 = vmatpush1.msra.mxu0 0.0
        %2143 = vmatprep.subr.mxu0 0.0
        %2144 = vmatpush1.msra.mxu0 0.0
        %2145 = vmatprep.subr.mxu0 0.0
        %2146 = vmatpush1.msra.mxu0 0.0
        %2147 = vmatprep.subr.mxu0 0.0
        %2148 = vmatpush1.msra.mxu0 0.0
        %2149 = vmatprep.subr.mxu0 0.0
        %2150 = vmatpush1.msra.mxu0 0.0
        %2151 = vmatprep.subr.mxu0 0.0
        %2152 = vmatpush1.msra.mxu0 0.0
        %2153 = vmatprep.subr.mxu0 0.0
        %2154 = vmatpush1.msra.mxu0 %v2118
        %2155 = vmatprep.subr.mxu0 0.0
        %2156 = vmatpush1.msra.mxu0 %v2117
        %2157 = vmatprep.subr.mxu0 0.0
        %2158 = vmatpush1.msra.mxu0 %v2116
        %2159 = vmatprep.subr.mxu0 0.0
        %2160 = vmatpush1.msra.mxu0 %v2115
        %2161 = vmatprep.subr.mxu0 0.0
        %2162 = vmatpush2.msra.mxu0 0.0
        %2163 = vmatprep.subr.mxu0 0.0
        %2164 = vmatpush2.msra.mxu0 0.0
        %2165 = vmatprep.subr.mxu0 0.0
        %2166 = vmatpush2.msra.mxu0 0.0
        %2167 = vmatprep.subr.mxu0 0.0
        %2168 = vmatpush2.msra.mxu0 0.0
        %2169 = vmatprep.subr.mxu0 0.0
        %2170 = vmatpush2.msra.mxu0 0.0
        %2171 = vmatprep.subr.mxu0 0.0
        %2172 = vmatpush2.msra.mxu0 0.0
        %2173 = vmatprep.subr.mxu0 0.0
        %2174 = vmatpush2.msra.mxu0 0.0
        %2175 = vmatprep.subr.mxu0 0.0
        %2176 = vmatpush2.msra.mxu0 0.0
        %2177 = vmatprep.subr.mxu0 0.0
        %2178 = vmatpush2.msra.mxu0 0.0
        %2179 = vmatprep.subr.mxu0 0.0
        %2180 = vmatpush2.msra.mxu0 0.0
        %2181 = vmatprep.subr.mxu0 0.0
        %2182 = vmatpush2.msra.mxu0 0.0
        %2183 = vmatprep.subr.mxu0 0.0
        %2184 = vmatpush2.msra.mxu0 0.0
        %2185 = vmatprep.subr.mxu0 0.0
        %2186 = vmatpush2.msra.mxu0 0.0
        %2187 = vmatprep.subr.mxu0 0.0
        %2188 = vmatpush2.msra.mxu0 0.0
        %2189 = vmatprep.subr.mxu0 0.0
        %2190 = vmatpush2.msra.mxu0 0.0
        %2191 = vmatprep.subr.mxu0 0.0
        %2192 = vmatpush2.msra.mxu0 0.0
        %2193 = vmatprep.mubr.f32.mxu0 0.0
        %2194 = vmatmul.mubr.f32.gmra.mxu0 %v2127
        %v2195 = vpop.f32.mrf.mxu0
        %v2196 = vadd.f32 %v2124, %v2195
        %v2197 = vpop.f32.mrf.mxu0
        %2198 = vdwg.mxu0
        %v2199 = vadd.f32 %v604, %v2196
        %v2200 = vld [vmem:[%s4] sm:$0x1]
        %v2201 = vld [vmem:[%s5] sm:$0x1]
        %v2202 = vsel %vm608, %v2199, 0.0
        %2203 = vadd.xlane.f32.xlu0 %v2202
        %v2204 = vpop.xlane.xlu0 %2203
        %v2205 = vmul.f32 %v2204, %v612
        %v2206 = vsub.f32 %v2199, %v2205
        %v2207 = vmul.f32 %v2206, %v2206
        %v2208 = vsel %vm608, %v2207, 0.0
        %2209 = vadd.xlane.f32.xlu0 %v2208
        %v2210 = vpop.xlane.xlu0 %2209
        %v2211 = vmul.f32 %v2210, %v612
        %v2212 = vadd.f32 %v2211, 1e-05
        %v2213 = vrsqrt.pop %v2212
        %v2214 = vmul.f32 %v2206, %v2213
        %v2216 = vlaneseq
        %v2217 = vshrl.u32 %v2216, 7
        %v2218 = vsub.s32 0, %v2217
        %v2219 = vrot.slane %v2200, %v2218
        %v2221 = vmul.f32 %v2214, %v2219
        %v2223 = vlaneseq
        %v2224 = vshrl.u32 %v2223, 7
        %v2225 = vsub.s32 0, %v2224
        %v2226 = vrot.slane %v2201, %v2225
        %v2228 = vadd.f32 %v2221, %v2226
        %v2229 = vld [vmem:[%s14] sm:$0xff]
        %v2230 = vld [vmem:[%s14 + $0x8] sm:$0xff]
        %v2231 = vld [vmem:[%s14 + $0x10] sm:$0xff]
        %v2232 = vld [vmem:[%s14 + $0x18] sm:$0xff]
        %v2233 = vld [vmem:[%s15] sm:$0x1]
        %v2235 = vlaneseq
        %v2236 = vshrl.u32 %v2235, 7
        %v2237 = vsub.s32 0, %v2236
        %v2238 = vrot.slane %v2233, %v2237
        %v2241 = vsel %vm608, %v2228, 0
        %2243 = vmatprep.subr.mxu0 0.0
        %2244 = vmatpush1.msra.mxu0 0.0
        %2245 = vmatprep.subr.mxu0 0.0
        %2246 = vmatpush1.msra.mxu0 0.0
        %2247 = vmatprep.subr.mxu0 0.0
        %2248 = vmatpush1.msra.mxu0 0.0
        %2249 = vmatprep.subr.mxu0 0.0
        %2250 = vmatpush1.msra.mxu0 0.0
        %2251 = vmatprep.subr.mxu0 0.0
        %2252 = vmatpush1.msra.mxu0 0.0
        %2253 = vmatprep.subr.mxu0 0.0
        %2254 = vmatpush1.msra.mxu0 0.0
        %2255 = vmatprep.subr.mxu0 0.0
        %2256 = vmatpush1.msra.mxu0 0.0
        %2257 = vmatprep.subr.mxu0 0.0
        %2258 = vmatpush1.msra.mxu0 0.0
        %2259 = vmatprep.subr.mxu0 0.0
        %2260 = vmatpush1.msra.mxu0 0.0
        %2261 = vmatprep.subr.mxu0 0.0
        %2262 = vmatpush1.msra.mxu0 0.0
        %2263 = vmatprep.subr.mxu0 0.0
        %2264 = vmatpush1.msra.mxu0 0.0
        %2265 = vmatprep.subr.mxu0 0.0
        %2266 = vmatpush1.msra.mxu0 0.0
        %2267 = vmatprep.subr.mxu0 0.0
        %2268 = vmatpush1.msra.mxu0 %v2232
        %2269 = vmatprep.subr.mxu0 0.0
        %2270 = vmatpush1.msra.mxu0 %v2231
        %2271 = vmatprep.subr.mxu0 0.0
        %2272 = vmatpush1.msra.mxu0 %v2230
        %2273 = vmatprep.subr.mxu0 0.0
        %2274 = vmatpush1.msra.mxu0 %v2229
        %2275 = vmatprep.subr.mxu0 0.0
        %2276 = vmatpush2.msra.mxu0 0.0
        %2277 = vmatprep.subr.mxu0 0.0
        %2278 = vmatpush2.msra.mxu0 0.0
        %2279 = vmatprep.subr.mxu0 0.0
        %2280 = vmatpush2.msra.mxu0 0.0
        %2281 = vmatprep.subr.mxu0 0.0
        %2282 = vmatpush2.msra.mxu0 0.0
        %2283 = vmatprep.subr.mxu0 0.0
        %2284 = vmatpush2.msra.mxu0 0.0
        %2285 = vmatprep.subr.mxu0 0.0
        %2286 = vmatpush2.msra.mxu0 0.0
        %2287 = vmatprep.subr.mxu0 0.0
        %2288 = vmatpush2.msra.mxu0 0.0
        %2289 = vmatprep.subr.mxu0 0.0
        %2290 = vmatpush2.msra.mxu0 0.0
        %2291 = vmatprep.subr.mxu0 0.0
        %2292 = vmatpush2.msra.mxu0 0.0
        %2293 = vmatprep.subr.mxu0 0.0
        %2294 = vmatpush2.msra.mxu0 0.0
        %2295 = vmatprep.subr.mxu0 0.0
        %2296 = vmatpush2.msra.mxu0 0.0
        %2297 = vmatprep.subr.mxu0 0.0
        %2298 = vmatpush2.msra.mxu0 0.0
        %2299 = vmatprep.subr.mxu0 0.0
        %2300 = vmatpush2.msra.mxu0 0.0
        %2301 = vmatprep.subr.mxu0 0.0
        %2302 = vmatpush2.msra.mxu0 0.0
        %2303 = vmatprep.subr.mxu0 0.0
        %2304 = vmatpush2.msra.mxu0 0.0
        %2305 = vmatprep.subr.mxu0 0.0
        %2306 = vmatpush2.msra.mxu0 0.0
        %2307 = vmatprep.mubr.f32.mxu0 0.0
        %2308 = vmatmul.mubr.f32.gmra.mxu0 %v2241
        %v2309 = vpop.f32.mrf.mxu0
        %v2310 = vadd.f32 %v2238, %v2309
        %v2311 = vpop.f32.mrf.mxu0
        %2312 = vdwg.mxu0
        %v2313 = vmul.f32 %v2310, 0.5
        %v2314 = vrcp.pop 1.4142135
        %v2315 = vmul.f32 %v2310, %v2314
        %v2316 = verf.f32.pop %v2315
        %v2317 = vadd.f32 %v2316, 1.0
        %v2318 = vmul.f32 %v2313, %v2317
        %v2319 = vld [vmem:[%s16] sm:$0xff]
        %v2320 = vld [vmem:[%s16 + $0x8] sm:$0xff]
        %v2321 = vld [vmem:[%s16 + $0x10] sm:$0xff]
        %v2322 = vld [vmem:[%s16 + $0x18] sm:$0xff]
        %v2323 = vld [vmem:[%s16 + $0x20] sm:$0xff]
        %v2324 = vld [vmem:[%s16 + $0x28] sm:$0xff]
        %v2325 = vld [vmem:[%s16 + $0x30] sm:$0xff]
        %v2326 = vld [vmem:[%s16 + $0x38] sm:$0xff]
        %v2327 = vld [vmem:[%s16 + $0x40] sm:$0xff]
        %v2328 = vld [vmem:[%s16 + $0x48] sm:$0xff]
        %v2329 = vld [vmem:[%s16 + $0x50] sm:$0xff]
        %v2330 = vld [vmem:[%s16 + $0x58] sm:$0xff]
        %v2331 = vld [vmem:[%s16 + $0x60] sm:$0xff]
        %v2332 = vld [vmem:[%s16 + $0x68] sm:$0xff]
        %v2333 = vld [vmem:[%s16 + $0x70] sm:$0xff]
        %v2334 = vld [vmem:[%s16 + $0x78] sm:$0xff]
        %v2335 = vld [vmem:[%s17] sm:$0x1]
        %v2337 = vlaneseq
        %v2338 = vshrl.u32 %v2337, 7
        %v2339 = vsub.s32 0, %v2338
        %v2340 = vrot.slane %v2335, %v2339
        %2342 = vmatprep.subr.mxu0 0.0
        %2343 = vmatpush1.msra.mxu0 %v2334
        %2344 = vmatprep.subr.mxu0 0.0
        %2345 = vmatpush1.msra.mxu0 %v2333
        %2346 = vmatprep.subr.mxu0 0.0
        %2347 = vmatpush1.msra.mxu0 %v2332
        %2348 = vmatprep.subr.mxu0 0.0
        %2349 = vmatpush1.msra.mxu0 %v2331
        %2350 = vmatprep.subr.mxu0 0.0
        %2351 = vmatpush1.msra.mxu0 %v2330
        %2352 = vmatprep.subr.mxu0 0.0
        %2353 = vmatpush1.msra.mxu0 %v2329
        %2354 = vmatprep.subr.mxu0 0.0
        %2355 = vmatpush1.msra.mxu0 %v2328
        %2356 = vmatprep.subr.mxu0 0.0
        %2357 = vmatpush1.msra.mxu0 %v2327
        %2358 = vmatprep.subr.mxu0 0.0
        %2359 = vmatpush1.msra.mxu0 %v2326
        %2360 = vmatprep.subr.mxu0 0.0
        %2361 = vmatpush1.msra.mxu0 %v2325
        %2362 = vmatprep.subr.mxu0 0.0
        %2363 = vmatpush1.msra.mxu0 %v2324
        %2364 = vmatprep.subr.mxu0 0.0
        %2365 = vmatpush1.msra.mxu0 %v2323
        %2366 = vmatprep.subr.mxu0 0.0
        %2367 = vmatpush1.msra.mxu0 %v2322
        %2368 = vmatprep.subr.mxu0 0.0
        %2369 = vmatpush1.msra.mxu0 %v2321
        %2370 = vmatprep.subr.mxu0 0.0
        %2371 = vmatpush1.msra.mxu0 %v2320
        %2372 = vmatprep.subr.mxu0 0.0
        %2373 = vmatpush1.msra.mxu0 %v2319
        %2374 = vmatprep.subr.mxu0 0.0
        %2375 = vmatpush2.msra.mxu0 0.0
        %2376 = vmatprep.subr.mxu0 0.0
        %2377 = vmatpush2.msra.mxu0 0.0
        %2378 = vmatprep.subr.mxu0 0.0
        %2379 = vmatpush2.msra.mxu0 0.0
        %2380 = vmatprep.subr.mxu0 0.0
        %2381 = vmatpush2.msra.mxu0 0.0
        %2382 = vmatprep.subr.mxu0 0.0
        %2383 = vmatpush2.msra.mxu0 0.0
        %2384 = vmatprep.subr.mxu0 0.0
        %2385 = vmatpush2.msra.mxu0 0.0
        %2386 = vmatprep.subr.mxu0 0.0
        %2387 = vmatpush2.msra.mxu0 0.0
        %2388 = vmatprep.subr.mxu0 0.0
        %2389 = vmatpush2.msra.mxu0 0.0
        %2390 = vmatprep.subr.mxu0 0.0
        %2391 = vmatpush2.msra.mxu0 0.0
        %2392 = vmatprep.subr.mxu0 0.0
        %2393 = vmatpush2.msra.mxu0 0.0
        %2394 = vmatprep.subr.mxu0 0.0
        %2395 = vmatpush2.msra.mxu0 0.0
        %2396 = vmatprep.subr.mxu0 0.0
        %2397 = vmatpush2.msra.mxu0 0.0
        %2398 = vmatprep.subr.mxu0 0.0
        %2399 = vmatpush2.msra.mxu0 0.0
        %2400 = vmatprep.subr.mxu0 0.0
        %2401 = vmatpush2.msra.mxu0 0.0
        %2402 = vmatprep.subr.mxu0 0.0
        %2403 = vmatpush2.msra.mxu0 0.0
        %2404 = vmatprep.subr.mxu0 0.0
        %2405 = vmatpush2.msra.mxu0 0.0
        %2406 = vmatprep.mubr.f32.mxu0 0.0
        %2407 = vmatmul.mubr.f32.gmra.mxu0 %v2318
        %v2408 = vpop.f32.mrf.mxu0
        %v2409 = vadd.f32 %v2340, %v2408
        %v2410 = vpop.f32.mrf.mxu0
        %2411 = vdwg.mxu0
        %v2412 = vadd.f32 %v2199, %v2409
        %2413 = vst.msk [vmem:[%s603] sm:$0xff] %vm608, %v2412
        %s2414 = sand.u32 %s427, 1
        %s2415 = scalar_lea.sflag [#allocation4], %s2414
        %s2416 = sand.u32 %s427, 1
        %s2417 = smul.addr %s2416, 8
        %s2418 = scalar_lea.vmem [#allocation7], %s2417
        // Predicated region
        $region101: #{tpu_custom_call.1} parent=91 // pred_check
          %p2419 = pneg %p437
        $region102: #{tpu_custom_call.1} parent=91 // pred_check_branch
          %2421 = sbr.rel (%p2419) target = $region104
        $region103: #{tpu_custom_call.1} parent=91 // pred_region
          %s2423 = ssub.s32 128, 128
          %2424 = vsyncadd %s2415, %s2423
          %s2425 = smul.addr %s36, 128
          %s2426 = scalar_lea.hbm %s18, %s2425
          %s2428 = sshll.u32 %s2418, 4
          %s2429 = int_to_ptr.vmem [resolvable:$true] %s2428
          %2431 = dma.vmem_to_hbm [thread:$0]  %s2429, 128, %s2426, %s2415
        $region104: #{tpu_custom_call.1} parent=91 // pred_fallthru
          _
      $region92: #{tpu_custom_call.1} parent=5 // pred_fallthru
        _
      %p2432 = scmp.le.s32.totalorder 2, %s31
      // Predicated region
      $region105: #{tpu_custom_call.1} parent=5 // pred_check
        %p2433 = pneg %p2432
      $region106: #{tpu_custom_call.1} parent=5 // pred_check_branch
        %2435 = sbr.rel (%p2433) target = $region108
      $region107: #{tpu_custom_call.1} parent=5 // pred_region
        %s2436 = ssub.s32 %s31, 2
        // Predicated region
        $region109: #{tpu_custom_call.1} parent=107 // pred_check
          %p2437 = pneg %p443
        $region110: #{tpu_custom_call.1} parent=107 // pred_check_branch
          %2439 = sbr.rel (%p2437) target = $region112
        $region111: #{tpu_custom_call.1} parent=107 // pred_region
          %s2440 = sand.u32 %s428, 1
          %s2441 = scalar_lea.sflag [#allocation4], %s2440
          %s2442 = sand.u32 %s428, 1
          %s2443 = smul.addr %s2442, 8
          %s2444 = scalar_lea.vmem [#allocation7], %s2443
          %2445 = dma.done %s2441, 128
        $region112: #{tpu_custom_call.1} parent=107 // pred_fallthru
          _
      $region108: #{tpu_custom_call.1} parent=5 // pred_fallthru
        _
    $region6: #{tpu_custom_call.1} parent=1 // loop_footer
      %s35 = sadd.s32 1, %s31
    $region7: #{tpu_custom_call.1} parent=1 // loop_footer_branch
      %30 = sbr.rel target = $region3
    $region8: #{tpu_custom_call.1} parent=1 // loop_exit
      _
    %2446 = vsyncpa [#allocation3], 1
    %s2447 = scalar_lea.sflag [#allocation3], 1
    %2448 = vsyncpa %s2447, 1
    %2449 = vsyncpa [#allocation6], 1
    %2450 = vsyncpa [#allocation4], 1
    %s2451 = scalar_lea.sflag [#allocation4], 1
    %2452 = vsyncpa %s2451, 1

</llo_original>
